<compile_context>
chip_gen: v7x
topology: tpu7x:2x2x1
jax: 0.10.0
libtpu: 0.0.40
codegen_flags: <defaults>
</compile_context>

<pallas_src>
import math

import jax
import jax.numpy as jnp
import numpy as np
from jax import lax
from jax.experimental import pallas as pl
from jax.experimental.pallas import tpu as pltpu

BN_EPS = 1e-5   # PyTorch BatchNorm2d default
LANE = 128


def _round_up(n, m):
    return ((n + m - 1) // m) * m


# ---------------------------------------------------------------------------
# Kernel 1 ("stem"): bn0 affine + pointwise C->NF projection + ReLU + mean
# over mel bins, streamed over time chunks.  grid = (B, T // t_chunk), both
# axes parallel.  Per-step working set is O(t_chunk * NF_pad) only.
# ---------------------------------------------------------------------------
def _stem_kernel(x_ref, scale_ref, shift_ref, w_bb_ref, b_bb_ref, xt_ref):
    _, C, Tc, F = x_ref.shape
    NFp = w_bb_ref.shape[1]

    x = x_ref[0]                                     # (C, Tc, F), F in lanes
    # bn0 (eval): per-mel-bin affine; scale/shift precomputed in the wrapper.
    xn = x * scale_ref[...] + shift_ref[...]         # (C, Tc, F)

    # TODO(synk): the timm backbone (features_only, out_indices=(2,3,4)) is
    # represented by a single pointwise conv + ReLU stand-in (single head).
    bias = b_bb_ref[...]                             # (1, NFp)
    acc = jnp.zeros((Tc, NFp), jnp.float32)
    # C->NF projection as VPU broadcast-FMAs (contraction depth 3 is far too
    # shallow for the MXU); the mean over F is accumulated online so the
    # (T*F, NF) feature map is never materialized in VMEM.
    for f in range(F):                               # static unroll over mel bins
        z = bias
        for c in range(C):
            z = z + xn[c, :, f:f + 1] * w_bb_ref[c:c + 1, :]   # (Tc,1)*(1,NFp)
        acc = acc + jnp.maximum(z, 0.0)
    xt_ref[0] = acc * (1.0 / F)                      # (Tc, NFp), NF in lanes


# ---------------------------------------------------------------------------
# Kernel 2 ("head"): pooling over time + fc1 + AttBlockV2.  grid = (B,).
# All matmul / output lane dims are padded to multiples of 128.
# ---------------------------------------------------------------------------
def _head_kernel(xt_ref, w_fc1_ref, b_fc1_ref, w_att_ref, b_att_ref,
                 w_cla_ref, b_cla_ref,
                 clip_ref, frame_ref, maxframe_ref, feat_ref):
    _, T, NFp = xt_ref.shape

    xt = xt_ref[0]                                   # (T, NFp) f32

    # features = AdaptiveAvgPool2d(1) of the stem output == mean over T of xt.
    feat_ref[...] = jnp.mean(xt, axis=0, keepdims=True)        # (1, NFp)

    # max_pool1d(k=3,s=1,p=1) + avg_pool1d(k=3,s=1,p=1) over time (sublanes).
    x_prev = pltpu.roll(xt, shift=1, axis=0)         # xt[t-1] (wrapped)
    x_next = pltpu.roll(xt, shift=T - 1, axis=0)     # xt[t+1] (wrapped)
    row = lax.broadcasted_iota(jnp.int32, (T, NFp), 0)
    neg_inf = float("-inf")
    p_max = jnp.where(row == 0, neg_inf, x_prev)
    n_max = jnp.where(row == T - 1, neg_inf, x_next)
    x1 = jnp.maximum(jnp.maximum(p_max, xt), n_max)  # max pool (pad = -inf)
    p_avg = jnp.where(row == 0, 0.0, x_prev)
    n_avg = jnp.where(row == T - 1, 0.0, x_next)
    x2 = (p_avg + xt + n_avg) * (1.0 / 3.0)          # avg pool (pad = 0, /3)
    xp = x1 + x2                                     # (T, NFp)
    # (dropout layers: identity in eval mode)

    # fc1 + ReLU  (bf16 operands, f32 accumulation)
    h = jnp.maximum(
        jnp.dot(xp.astype(jnp.bfloat16), w_fc1_ref[...],
                preferred_element_type=jnp.float32) + b_fc1_ref[...], 0.0)
    hb = h.astype(jnp.bfloat16)

    # AttBlockV2 (activation='sigmoid'); class dim zero-padded to 128 lanes.
    a = jnp.tanh(jnp.dot(hb, w_att_ref[...],
                         preferred_element_type=jnp.float32) + b_att_ref[...])
    cla = jax.nn.sigmoid(jnp.dot(hb, w_cla_ref[...],
                                 preferred_element_type=jnp.float32)
                         + b_cla_ref[...])           # (T, NCp)

    a_max = jnp.max(a, axis=0, keepdims=True)
    e = jnp.exp(a - a_max)
    inv_den = pl.reciprocal(jnp.sum(e, axis=0, keepdims=True), approx=True)
    norm_att = e * inv_den                           # softmax over time

    clip_ref[...] = jnp.sum(norm_att * cla, axis=0, keepdims=True)   # (1, NCp)
    maxframe_ref[...] = jnp.max(cla, axis=0, keepdims=True)          # (1, NCp)
    # Framewise output emitted as (T, NCp): lane-dense stores, no in-kernel
    # transpose; the (B, NC, T) layout is produced in the wrapper.
    frame_ref[0] = cla


# ---------------------------------------------------------------------------
# Wrapper: parameter packing / padding, pallas_calls, output de-padding.
# ---------------------------------------------------------------------------
def bird_sed_forward(x_nchw, params, *, t_chunk=8, return_features=True):
    x = jnp.asarray(x_nchw, jnp.float32)             # (B, C, T, F), natural layout
    B, C, T, F = x.shape
    NF = params["w_fc1"].shape[0]
    NC = params["w_att"].shape[0]
    NFp = _round_up(NF, LANE)
    NCp = _round_up(NC, LANE)

    if T % t_chunk != 0 or t_chunk % 8 != 0:
        t_chunk = T                                  # fall back to one chunk
    NT = T // t_chunk

    f32 = jnp.float32
    bf16 = jnp.bfloat16

    # bn0 eval-mode affine folded to per-mel-bin scale/shift (computed once).
    gamma = params["bn_gamma"].astype(f32)
    inv_std = 1.0 / jnp.sqrt(params["bn_var"].astype(f32) + BN_EPS)
    scale = (gamma * inv_std).reshape(1, F)
    shift = (params["bn_beta"].astype(f32)
             - params["bn_mean"].astype(f32) * gamma * inv_std).reshape(1, F)

    def pad2(a, rows, cols):
        a = jnp.asarray(a, f32)
        return jnp.pad(a, ((0, rows - a.shape[0]), (0, cols - a.shape[1])))

    # Stem weights (kept in f32; the stem runs on the VPU).
    w_bb = pad2(params["w_bb"].T, C, NFp)            # (C, NFp)
    b_bb = pad2(params["b_bb"].reshape(1, NF), 1, NFp)

    vmem_bytes = 32 * 1024 * 1024                    # explicit (v5e default = 16 MiB)

    stem_grid = pltpu.PrefetchScalarGridSpec(
        num_scalar_prefetch=0,
        grid=(B, NT),
        in_specs=[
            pl.BlockSpec((1, C, t_chunk, F), lambda b, t: (b, 0, t, 0)),
            pl.BlockSpec((1, F), lambda b, t: (0, 0)),
            pl.BlockSpec((1, F), lambda b, t: (0, 0)),
            pl.BlockSpec((C, NFp), lambda b, t: (0, 0)),
            pl.BlockSpec((1, NFp), lambda b, t: (0, 0)),
        ],
        out_specs=pl.BlockSpec((1, t_chunk, NFp), lambda b, t: (b, t, 0)),
    )
    xt = pl.pallas_call(
        _stem_kernel,
        out_shape=jax.ShapeDtypeStruct((B, T, NFp), f32),
        grid_spec=stem_grid,
        compiler_params=pltpu.CompilerParams(
            dimension_semantics=("parallel", "parallel"),
            vmem_limit_bytes=vmem_bytes),
    )(x, scale, shift, w_bb, b_bb)                   # (B, T, NFp), NF in lanes

    # Head weights: zero-padded to lane multiples, bf16 for the MXU.
    w_fc1 = pad2(params["w_fc1"].T, NFp, NFp).astype(bf16)
    b_fc1 = pad2(params["b_fc1"].reshape(1, NF), 1, NFp)
    w_att = pad2(params["w_att"].T, NFp, NCp).astype(bf16)
    b_att = pad2(params["b_att"].reshape(1, NC), 1, NCp)
    w_cla = pad2(params["w_cla"].T, NFp, NCp).astype(bf16)
    b_cla = pad2(params["b_cla"].reshape(1, NC), 1, NCp)

    # Constant index maps -> each weight is DMA'd into VMEM once for the whole
    # grid.  (On v7x, pipeline_mode=pl.Buffered(1) would also halve the
    # resident buffer allocation for these operands.)
    def const_spec(arr):
        shape = arr.shape
        return pl.BlockSpec(shape, lambda b, _n=len(shape): (0,) * _n)

    head_grid = pltpu.PrefetchScalarGridSpec(
        num_scalar_prefetch=0,
        grid=(B,),
        in_specs=[
            pl.BlockSpec((1, T, NFp), lambda b: (b, 0, 0)),
            const_spec(w_fc1), const_spec(b_fc1),
            const_spec(w_att), const_spec(b_att),
            const_spec(w_cla), const_spec(b_cla),
        ],
        out_specs=(
            pl.BlockSpec((1, NCp), lambda b: (b, 0)),        # clipwise
            pl.BlockSpec((1, T, NCp), lambda b: (b, 0, 0)),  # framewise (T, NCp)
            pl.BlockSpec((1, NCp), lambda b: (b, 0)),        # maxframewise
            pl.BlockSpec((1, NFp), lambda b: (b, 0)),        # features
        ),
    )
    clip, frame, maxframe, feats = pl.pallas_call(
        _head_kernel,
        out_shape=(
            jax.ShapeDtypeStruct((B, NCp), f32),
            jax.ShapeDtypeStruct((B, T, NCp), f32),
            jax.ShapeDtypeStruct((B, NCp), f32),
            jax.ShapeDtypeStruct((B, NFp), f32),
        ),
        grid_spec=head_grid,
        compiler_params=pltpu.CompilerParams(
            dimension_semantics=("parallel",),
            vmem_limit_bytes=vmem_bytes),
    )(xt, w_fc1, b_fc1, w_att, b_att, w_cla, b_cla)

    out = {
        "clipwise_output": clip[:, :NC],
        # PyTorch layout (B, NC, T): depad + transpose in the wrapper (cheap
        # XLA layout plumbing; keeps all kernel stores lane-dense).
        "framewise_output": jnp.transpose(frame[:, :, :NC], (0, 2, 1)),
        "maxframewise_output": maxframe[:, :NC],
    }
    if return_features:
        out["features"] = feats[:, :NF]
    return out


# ---------------------------------------------------------------------------
# Deterministic parameter init (mirrors module __init__ / init_weight; the
# bn0 running stats are given non-trivial values to exercise the folding).
# ---------------------------------------------------------------------------
def _xavier_uniform(key, shape):
    fan_out, fan_in = shape
    bound = math.sqrt(6.0 / (fan_in + fan_out))
    return jax.random.uniform(key, shape, jnp.float32, -bound, bound)


def init_params(key, *, in_chans, mel_bins, num_features, num_classes):
    k = jax.random.split(key, 6)
    return {
        # bn0: init_bn -> weight=1, bias=0; running stats as after training.
        "bn_gamma": jnp.ones((mel_bins,), jnp.float32),
        "bn_beta": jnp.zeros((mel_bins,), jnp.float32),
        "bn_mean": 0.1 * jax.random.normal(k[4], (mel_bins,), jnp.float32),
        "bn_var": jax.random.uniform(k[5], (mel_bins,), jnp.float32, 0.5, 1.5),
        # backbone stand-in (TODO(synk): replaces the timm backbone)
        "w_bb": _xavier_uniform(k[0], (num_features, in_chans)),
        "b_bb": jnp.zeros((num_features,), jnp.float32),
        # fc1 (init_layer: xavier_uniform, bias=0)
        "w_fc1": _xavier_uniform(k[1], (num_features, num_features)),
        "b_fc1": jnp.zeros((num_features,), jnp.float32),
        # AttBlockV2 att / cla (1x1 Conv1d == Linear, xavier, bias=0)
        "w_att": _xavier_uniform(k[2], (num_classes, num_features)),
        "b_att": jnp.zeros((num_classes,), jnp.float32),
        "w_cla": _xavier_uniform(k[3], (num_classes, num_features)),
        "b_cla": jnp.zeros((num_classes,), jnp.float32),
    }


# ---------------------------------------------------------------------------
# Pure-JAX reference (mirrors the PyTorch eval forward; fc1/att/cla matmuls
# also use bf16 operands to mirror the kernel).
# ---------------------------------------------------------------------------
def reference_forward(x, p):
    f32 = jnp.float32
    bf16 = jnp.bfloat16
    scale = p["bn_gamma"] / jnp.sqrt(p["bn_var"] + BN_EPS)
    shift = p["bn_beta"] - p["bn_mean"] * scale
    xbn = x * scale[None, None, None, :] + shift[None, None, None, :]   # (B,C,T,F)
    feat = jax.nn.relu(
        jnp.einsum("bctf,kc->bktf", xbn, p["w_bb"],
                   precision=jax.lax.Precision.HIGHEST)
        + p["b_bb"][None, :, None, None])                               # (B,NF,T,F)
    features = jnp.mean(feat, axis=(2, 3))                              # (B,NF)
    xt = jnp.mean(feat, axis=3)                                         # (B,NF,T)

    ninf = jnp.full_like(xt[..., :1], -jnp.inf)
    zero = jnp.zeros_like(xt[..., :1])
    prev_m = jnp.concatenate([ninf, xt[..., :-1]], axis=-1)
    next_m = jnp.concatenate([xt[..., 1:], ninf], axis=-1)
    x1 = jnp.maximum(jnp.maximum(prev_m, xt), next_m)
    prev_a = jnp.concatenate([zero, xt[..., :-1]], axis=-1)
    next_a = jnp.concatenate([xt[..., 1:], zero], axis=-1)
    x2 = (prev_a + xt + next_a) / 3.0
    xp = x1 + x2                                                        # (B,NF,T)

    h = jax.nn.relu(
        jnp.einsum("bct,dc->bdt", xp.astype(bf16), p["w_fc1"].astype(bf16),
                   preferred_element_type=f32) + p["b_fc1"][None, :, None])
    hb = h.astype(bf16)
    a = jnp.tanh(
        jnp.einsum("bct,kc->bkt", hb, p["w_att"].astype(bf16),
                   preferred_element_type=f32) + p["b_att"][None, :, None])
    norm_att = jax.nn.softmax(a, axis=-1)
    cla = jax.nn.sigmoid(
        jnp.einsum("bct,kc->bkt", hb, p["w_cla"].astype(bf16),
                   preferred_element_type=f32) + p["b_cla"][None, :, None])
    clip = jnp.sum(norm_att * cla, axis=2)
    maxf = jnp.max(cla, axis=2)
    return clip, cla, maxf, features


if __name__ == "__main__":
    # x: (B, C, T, F) with F == CFG.img_size[1] (bn0 channels).
    B, C, T, F = 2, 3, 16, 16
    NF, NC = 32, 8                    # backbone.num_features, num_classes

    key = jax.random.PRNGKey(0)
    kx, kp = jax.random.split(key)
    x = jax.random.normal(kx, (B, C, T, F), jnp.float32)
    params = init_params(kp, in_chans=C, mel_bins=F,
                         num_features=NF, num_classes=NC)

    out = bird_sed_forward(x, params, t_chunk=8, return_features=True)
    out = jax.tree_util.tree_map(jax.block_until_ready, out)

    clip_r, cla_r, maxf_r, feats_r = reference_forward(x, params)
    tol = dict(rtol=5e-3, atol=5e-3)
    np.testing.assert_allclose(np.asarray(out["clipwise_output"]),
                               np.asarray(clip_r), **tol)
    np.testing.assert_allclose(np.asarray(out["framewise_output"]),
                               np.asarray(cla_r), **tol)
    np.testing.assert_allclose(np.asarray(out["maxframewise_output"]),
                               np.asarray(maxf_r), **tol)
    np.testing.assert_allclose(np.asarray(out["features"]),
                               np.asarray(feats_r), **tol)
    print("KERNEL_OK")
</pallas_src>

<mosaic_0001>
module attributes {stable_mosaic.version = 11 : i64} {
  func.func @_stem_kernel(%arg0: i32, %arg1: i32, %arg2: memref<1x3x8x16xf32, #tpu.memory_space<vmem>>, %arg3: memref<1x16xf32, #tpu.memory_space<vmem>>, %arg4: memref<1x16xf32, #tpu.memory_space<vmem>>, %arg5: memref<3x128xf32, #tpu.memory_space<vmem>>, %arg6: memref<1x128xf32, #tpu.memory_space<vmem>>, %arg7: memref<1x8x128xf32, #tpu.memory_space<vmem>>) attributes {dimension_semantics = [#tpu.dimension_semantics<parallel>, #tpu.dimension_semantics<parallel>], iteration_bounds = array<i64: 2, 2>, scalar_prefetch = 0 : i64, scratch_operands = 0 : i64, tpu.core_type = #tpu.core_type<tc>, window_params = [{transform_indices = @transform_0, window_bounds = array<i64: 1, 3, 8, 16>}, {pipeline_mode = #tpu.pipeline_mode<synchronous>, transform_indices = @transform_1, window_bounds = array<i64: 1, 16>}, {pipeline_mode = #tpu.pipeline_mode<synchronous>, transform_indices = @transform_2, window_bounds = array<i64: 1, 16>}, {pipeline_mode = #tpu.pipeline_mode<synchronous>, transform_indices = @transform_3, window_bounds = array<i64: 3, 128>}, {pipeline_mode = #tpu.pipeline_mode<synchronous>, transform_indices = @transform_4, window_bounds = array<i64: 1, 128>}, {transform_indices = @transform_5, window_bounds = array<i64: 1, 8, 128>}]} {
    %c0 = arith.constant 0 : index
    %c0_0 = arith.constant 0 : index
    %c0_1 = arith.constant 0 : index
    %c0_2 = arith.constant 0 : index
    %0 = vector.load %arg2[%c0, %c0_0, %c0_1, %c0_2] : memref<1x3x8x16xf32, #tpu.memory_space<vmem>>, vector<1x3x8x16xf32>
    %1 = vector.shape_cast %0 : vector<1x3x8x16xf32> to vector<3x8x16xf32>
    %c0_3 = arith.constant 0 : index
    %c0_4 = arith.constant 0 : index
    %2 = vector.load %arg3[%c0_3, %c0_4] : memref<1x16xf32, #tpu.memory_space<vmem>>, vector<1x16xf32>
    %3 = vector.shape_cast %2 : vector<1x16xf32> to vector<1x1x16xf32>
    %4 = vector.broadcast %3 : vector<1x1x16xf32> to vector<3x8x16xf32>
    %5 = arith.mulf %1, %4 : vector<3x8x16xf32>
    %c0_5 = arith.constant 0 : index
    %c0_6 = arith.constant 0 : index
    %6 = vector.load %arg4[%c0_5, %c0_6] : memref<1x16xf32, #tpu.memory_space<vmem>>, vector<1x16xf32>
    %7 = vector.shape_cast %6 : vector<1x16xf32> to vector<1x1x16xf32>
    %8 = vector.broadcast %7 : vector<1x1x16xf32> to vector<3x8x16xf32>
    %9 = arith.addf %5, %8 : vector<3x8x16xf32>
    %c0_7 = arith.constant 0 : index
    %c0_8 = arith.constant 0 : index
    %10 = vector.load %arg6[%c0_7, %c0_8] : memref<1x128xf32, #tpu.memory_space<vmem>>, vector<1x128xf32>
    %cst = arith.constant 0.000000e+00 : f32
    %11 = vector.broadcast %cst : f32 to vector<8x128xf32>
    %12 = vector.extract_strided_slice %9 {offsets = [0, 0, 0], sizes = [1, 8, 1], strides = [1, 1, 1]} : vector<3x8x16xf32> to vector<1x8x1xf32>
    %13 = vector.shape_cast %12 : vector<1x8x1xf32> to vector<8x1xf32>
    %c0_9 = arith.constant 0 : index
    %c0_10 = arith.constant 0 : index
    %14 = vector.load %arg5[%c0_9, %c0_10] : memref<3x128xf32, #tpu.memory_space<vmem>>, vector<1x128xf32>
    %15 = vector.broadcast %13 : vector<8x1xf32> to vector<8x128xf32>
    %16 = vector.broadcast %14 : vector<1x128xf32> to vector<8x128xf32>
    %17 = arith.mulf %15, %16 : vector<8x128xf32>
    %18 = vector.broadcast %10 : vector<1x128xf32> to vector<8x128xf32>
    %19 = arith.addf %18, %17 : vector<8x128xf32>
    %20 = vector.extract_strided_slice %9 {offsets = [1, 0, 0], sizes = [1, 8, 1], strides = [1, 1, 1]} : vector<3x8x16xf32> to vector<1x8x1xf32>
    %21 = vector.shape_cast %20 : vector<1x8x1xf32> to vector<8x1xf32>
    %c1 = arith.constant 1 : index
    %c0_11 = arith.constant 0 : index
    %22 = vector.load %arg5[%c1, %c0_11] : memref<3x128xf32, #tpu.memory_space<vmem>>, vector<1x128xf32>
    %23 = vector.broadcast %21 : vector<8x1xf32> to vector<8x128xf32>
    %24 = vector.broadcast %22 : vector<1x128xf32> to vector<8x128xf32>
    %25 = arith.mulf %23, %24 : vector<8x128xf32>
    %26 = arith.addf %19, %25 : vector<8x128xf32>
    %27 = vector.extract_strided_slice %9 {offsets = [2, 0, 0], sizes = [1, 8, 1], strides = [1, 1, 1]} : vector<3x8x16xf32> to vector<1x8x1xf32>
    %28 = vector.shape_cast %27 : vector<1x8x1xf32> to vector<8x1xf32>
    %c2 = arith.constant 2 : index
    %c0_12 = arith.constant 0 : index
    %29 = vector.load %arg5[%c2, %c0_12] : memref<3x128xf32, #tpu.memory_space<vmem>>, vector<1x128xf32>
    %30 = vector.broadcast %28 : vector<8x1xf32> to vector<8x128xf32>
    %31 = vector.broadcast %29 : vector<1x128xf32> to vector<8x128xf32>
    %32 = arith.mulf %30, %31 : vector<8x128xf32>
    %33 = arith.addf %26, %32 : vector<8x128xf32>
    %cst_13 = arith.constant 0.000000e+00 : f32
    %34 = vector.broadcast %cst_13 : f32 to vector<8x128xf32>
    %35 = arith.maximumf %33, %34 : vector<8x128xf32>
    %36 = arith.addf %11, %35 : vector<8x128xf32>
    %37 = vector.extract_strided_slice %9 {offsets = [0, 0, 1], sizes = [1, 8, 1], strides = [1, 1, 1]} : vector<3x8x16xf32> to vector<1x8x1xf32>
    %38 = vector.shape_cast %37 : vector<1x8x1xf32> to vector<8x1xf32>
    %c0_14 = arith.constant 0 : index
    %c0_15 = arith.constant 0 : index
    %39 = vector.load %arg5[%c0_14, %c0_15] : memref<3x128xf32, #tpu.memory_space<vmem>>, vector<1x128xf32>
    %40 = vector.broadcast %38 : vector<8x1xf32> to vector<8x128xf32>
    %41 = vector.broadcast %39 : vector<1x128xf32> to vector<8x128xf32>
    %42 = arith.mulf %40, %41 : vector<8x128xf32>
    %43 = vector.broadcast %10 : vector<1x128xf32> to vector<8x128xf32>
    %44 = arith.addf %43, %42 : vector<8x128xf32>
    %45 = vector.extract_strided_slice %9 {offsets = [1, 0, 1], sizes = [1, 8, 1], strides = [1, 1, 1]} : vector<3x8x16xf32> to vector<1x8x1xf32>
    %46 = vector.shape_cast %45 : vector<1x8x1xf32> to vector<8x1xf32>
    %c1_16 = arith.constant 1 : index
    %c0_17 = arith.constant 0 : index
    %47 = vector.load %arg5[%c1_16, %c0_17] : memref<3x128xf32, #tpu.memory_space<vmem>>, vector<1x128xf32>
    %48 = vector.broadcast %46 : vector<8x1xf32> to vector<8x128xf32>
    %49 = vector.broadcast %47 : vector<1x128xf32> to vector<8x128xf32>
    %50 = arith.mulf %48, %49 : vector<8x128xf32>
    %51 = arith.addf %44, %50 : vector<8x128xf32>
    %52 = vector.extract_strided_slice %9 {offsets = [2, 0, 1], sizes = [1, 8, 1], strides = [1, 1, 1]} : vector<3x8x16xf32> to vector<1x8x1xf32>
    %53 = vector.shape_cast %52 : vector<1x8x1xf32> to vector<8x1xf32>
    %c2_18 = arith.constant 2 : index
    %c0_19 = arith.constant 0 : index
    %54 = vector.load %arg5[%c2_18, %c0_19] : memref<3x128xf32, #tpu.memory_space<vmem>>, vector<1x128xf32>
    %55 = vector.broadcast %53 : vector<8x1xf32> to vector<8x128xf32>
    %56 = vector.broadcast %54 : vector<1x128xf32> to vector<8x128xf32>
    %57 = arith.mulf %55, %56 : vector<8x128xf32>
    %58 = arith.addf %51, %57 : vector<8x128xf32>
    %cst_20 = arith.constant 0.000000e+00 : f32
    %59 = vector.broadcast %cst_20 : f32 to vector<8x128xf32>
    %60 = arith.maximumf %58, %59 : vector<8x128xf32>
    %61 = arith.addf %36, %60 : vector<8x128xf32>
    %62 = vector.extract_strided_slice %9 {offsets = [0, 0, 2], sizes = [1, 8, 1], strides = [1, 1, 1]} : vector<3x8x16xf32> to vector<1x8x1xf32>
    %63 = vector.shape_cast %62 : vector<1x8x1xf32> to vector<8x1xf32>
    %c0_21 = arith.constant 0 : index
    %c0_22 = arith.constant 0 : index
    %64 = vector.load %arg5[%c0_21, %c0_22] : memref<3x128xf32, #tpu.memory_space<vmem>>, vector<1x128xf32>
    %65 = vector.broadcast %63 : vector<8x1xf32> to vector<8x128xf32>
    %66 = vector.broadcast %64 : vector<1x128xf32> to vector<8x128xf32>
    %67 = arith.mulf %65, %66 : vector<8x128xf32>
    %68 = vector.broadcast %10 : vector<1x128xf32> to vector<8x128xf32>
    %69 = arith.addf %68, %67 : vector<8x128xf32>
    %70 = vector.extract_strided_slice %9 {offsets = [1, 0, 2], sizes = [1, 8, 1], strides = [1, 1, 1]} : vector<3x8x16xf32> to vector<1x8x1xf32>
    %71 = vector.shape_cast %70 : vector<1x8x1xf32> to vector<8x1xf32>
    %c1_23 = arith.constant 1 : index
    %c0_24 = arith.constant 0 : index
    %72 = vector.load %arg5[%c1_23, %c0_24] : memref<3x128xf32, #tpu.memory_space<vmem>>, vector<1x128xf32>
    %73 = vector.broadcast %71 : vector<8x1xf32> to vector<8x128xf32>
    %74 = vector.broadcast %72 : vector<1x128xf32> to vector<8x128xf32>
    %75 = arith.mulf %73, %74 : vector<8x128xf32>
    %76 = arith.addf %69, %75 : vector<8x128xf32>
    %77 = vector.extract_strided_slice %9 {offsets = [2, 0, 2], sizes = [1, 8, 1], strides = [1, 1, 1]} : vector<3x8x16xf32> to vector<1x8x1xf32>
    %78 = vector.shape_cast %77 : vector<1x8x1xf32> to vector<8x1xf32>
    %c2_25 = arith.constant 2 : index
    %c0_26 = arith.constant 0 : index
    %79 = vector.load %arg5[%c2_25, %c0_26] : memref<3x128xf32, #tpu.memory_space<vmem>>, vector<1x128xf32>
    %80 = vector.broadcast %78 : vector<8x1xf32> to vector<8x128xf32>
    %81 = vector.broadcast %79 : vector<1x128xf32> to vector<8x128xf32>
    %82 = arith.mulf %80, %81 : vector<8x128xf32>
    %83 = arith.addf %76, %82 : vector<8x128xf32>
    %cst_27 = arith.constant 0.000000e+00 : f32
    %84 = vector.broadcast %cst_27 : f32 to vector<8x128xf32>
    %85 = arith.maximumf %83, %84 : vector<8x128xf32>
    %86 = arith.addf %61, %85 : vector<8x128xf32>
    %87 = vector.extract_strided_slice %9 {offsets = [0, 0, 3], sizes = [1, 8, 1], strides = [1, 1, 1]} : vector<3x8x16xf32> to vector<1x8x1xf32>
    %88 = vector.shape_cast %87 : vector<1x8x1xf32> to vector<8x1xf32>
    %c0_28 = arith.constant 0 : index
    %c0_29 = arith.constant 0 : index
    %89 = vector.load %arg5[%c0_28, %c0_29] : memref<3x128xf32, #tpu.memory_space<vmem>>, vector<1x128xf32>
    %90 = vector.broadcast %88 : vector<8x1xf32> to vector<8x128xf32>
    %91 = vector.broadcast %89 : vector<1x128xf32> to vector<8x128xf32>
    %92 = arith.mulf %90, %91 : vector<8x128xf32>
    %93 = vector.broadcast %10 : vector<1x128xf32> to vector<8x128xf32>
    %94 = arith.addf %93, %92 : vector<8x128xf32>
    %95 = vector.extract_strided_slice %9 {offsets = [1, 0, 3], sizes = [1, 8, 1], strides = [1, 1, 1]} : vector<3x8x16xf32> to vector<1x8x1xf32>
    %96 = vector.shape_cast %95 : vector<1x8x1xf32> to vector<8x1xf32>
    %c1_30 = arith.constant 1 : index
    %c0_31 = arith.constant 0 : index
    %97 = vector.load %arg5[%c1_30, %c0_31] : memref<3x128xf32, #tpu.memory_space<vmem>>, vector<1x128xf32>
    %98 = vector.broadcast %96 : vector<8x1xf32> to vector<8x128xf32>
    %99 = vector.broadcast %97 : vector<1x128xf32> to vector<8x128xf32>
    %100 = arith.mulf %98, %99 : vector<8x128xf32>
    %101 = arith.addf %94, %100 : vector<8x128xf32>
    %102 = vector.extract_strided_slice %9 {offsets = [2, 0, 3], sizes = [1, 8, 1], strides = [1, 1, 1]} : vector<3x8x16xf32> to vector<1x8x1xf32>
    %103 = vector.shape_cast %102 : vector<1x8x1xf32> to vector<8x1xf32>
    %c2_32 = arith.constant 2 : index
    %c0_33 = arith.constant 0 : index
    %104 = vector.load %arg5[%c2_32, %c0_33] : memref<3x128xf32, #tpu.memory_space<vmem>>, vector<1x128xf32>
    %105 = vector.broadcast %103 : vector<8x1xf32> to vector<8x128xf32>
    %106 = vector.broadcast %104 : vector<1x128xf32> to vector<8x128xf32>
    %107 = arith.mulf %105, %106 : vector<8x128xf32>
    %108 = arith.addf %101, %107 : vector<8x128xf32>
    %cst_34 = arith.constant 0.000000e+00 : f32
    %109 = vector.broadcast %cst_34 : f32 to vector<8x128xf32>
    %110 = arith.maximumf %108, %109 : vector<8x128xf32>
    %111 = arith.addf %86, %110 : vector<8x128xf32>
    %112 = vector.extract_strided_slice %9 {offsets = [0, 0, 4], sizes = [1, 8, 1], strides = [1, 1, 1]} : vector<3x8x16xf32> to vector<1x8x1xf32>
    %113 = vector.shape_cast %112 : vector<1x8x1xf32> to vector<8x1xf32>
    %c0_35 = arith.constant 0 : index
    %c0_36 = arith.constant 0 : index
    %114 = vector.load %arg5[%c0_35, %c0_36] : memref<3x128xf32, #tpu.memory_space<vmem>>, vector<1x128xf32>
    %115 = vector.broadcast %113 : vector<8x1xf32> to vector<8x128xf32>
    %116 = vector.broadcast %114 : vector<1x128xf32> to vector<8x128xf32>
    %117 = arith.mulf %115, %116 : vector<8x128xf32>
    %118 = vector.broadcast %10 : vector<1x128xf32> to vector<8x128xf32>
    %119 = arith.addf %118, %117 : vector<8x128xf32>
    %120 = vector.extract_strided_slice %9 {offsets = [1, 0, 4], sizes = [1, 8, 1], strides = [1, 1, 1]} : vector<3x8x16xf32> to vector<1x8x1xf32>
    %121 = vector.shape_cast %120 : vector<1x8x1xf32> to vector<8x1xf32>
    %c1_37 = arith.constant 1 : index
    %c0_38 = arith.constant 0 : index
    %122 = vector.load %arg5[%c1_37, %c0_38] : memref<3x128xf32, #tpu.memory_space<vmem>>, vector<1x128xf32>
    %123 = vector.broadcast %121 : vector<8x1xf32> to vector<8x128xf32>
    %124 = vector.broadcast %122 : vector<1x128xf32> to vector<8x128xf32>
    %125 = arith.mulf %123, %124 : vector<8x128xf32>
    %126 = arith.addf %119, %125 : vector<8x128xf32>
    %127 = vector.extract_strided_slice %9 {offsets = [2, 0, 4], sizes = [1, 8, 1], strides = [1, 1, 1]} : vector<3x8x16xf32> to vector<1x8x1xf32>
    %128 = vector.shape_cast %127 : vector<1x8x1xf32> to vector<8x1xf32>
    %c2_39 = arith.constant 2 : index
    %c0_40 = arith.constant 0 : index
    %129 = vector.load %arg5[%c2_39, %c0_40] : memref<3x128xf32, #tpu.memory_space<vmem>>, vector<1x128xf32>
    %130 = vector.broadcast %128 : vector<8x1xf32> to vector<8x128xf32>
    %131 = vector.broadcast %129 : vector<1x128xf32> to vector<8x128xf32>
    %132 = arith.mulf %130, %131 : vector<8x128xf32>
    %133 = arith.addf %126, %132 : vector<8x128xf32>
    %cst_41 = arith.constant 0.000000e+00 : f32
    %134 = vector.broadcast %cst_41 : f32 to vector<8x128xf32>
    %135 = arith.maximumf %133, %134 : vector<8x128xf32>
    %136 = arith.addf %111, %135 : vector<8x128xf32>
    %137 = vector.extract_strided_slice %9 {offsets = [0, 0, 5], sizes = [1, 8, 1], strides = [1, 1, 1]} : vector<3x8x16xf32> to vector<1x8x1xf32>
    %138 = vector.shape_cast %137 : vector<1x8x1xf32> to vector<8x1xf32>
    %c0_42 = arith.constant 0 : index
    %c0_43 = arith.constant 0 : index
    %139 = vector.load %arg5[%c0_42, %c0_43] : memref<3x128xf32, #tpu.memory_space<vmem>>, vector<1x128xf32>
    %140 = vector.broadcast %138 : vector<8x1xf32> to vector<8x128xf32>
    %141 = vector.broadcast %139 : vector<1x128xf32> to vector<8x128xf32>
    %142 = arith.mulf %140, %141 : vector<8x128xf32>
    %143 = vector.broadcast %10 : vector<1x128xf32> to vector<8x128xf32>
    %144 = arith.addf %143, %142 : vector<8x128xf32>
    %145 = vector.extract_strided_slice %9 {offsets = [1, 0, 5], sizes = [1, 8, 1], strides = [1, 1, 1]} : vector<3x8x16xf32> to vector<1x8x1xf32>
    %146 = vector.shape_cast %145 : vector<1x8x1xf32> to vector<8x1xf32>
    %c1_44 = arith.constant 1 : index
    %c0_45 = arith.constant 0 : index
    %147 = vector.load %arg5[%c1_44, %c0_45] : memref<3x128xf32, #tpu.memory_space<vmem>>, vector<1x128xf32>
    %148 = vector.broadcast %146 : vector<8x1xf32> to vector<8x128xf32>
    %149 = vector.broadcast %147 : vector<1x128xf32> to vector<8x128xf32>
    %150 = arith.mulf %148, %149 : vector<8x128xf32>
    %151 = arith.addf %144, %150 : vector<8x128xf32>
    %152 = vector.extract_strided_slice %9 {offsets = [2, 0, 5], sizes = [1, 8, 1], strides = [1, 1, 1]} : vector<3x8x16xf32> to vector<1x8x1xf32>
    %153 = vector.shape_cast %152 : vector<1x8x1xf32> to vector<8x1xf32>
    %c2_46 = arith.constant 2 : index
    %c0_47 = arith.constant 0 : index
    %154 = vector.load %arg5[%c2_46, %c0_47] : memref<3x128xf32, #tpu.memory_space<vmem>>, vector<1x128xf32>
    %155 = vector.broadcast %153 : vector<8x1xf32> to vector<8x128xf32>
    %156 = vector.broadcast %154 : vector<1x128xf32> to vector<8x128xf32>
    %157 = arith.mulf %155, %156 : vector<8x128xf32>
    %158 = arith.addf %151, %157 : vector<8x128xf32>
    %cst_48 = arith.constant 0.000000e+00 : f32
    %159 = vector.broadcast %cst_48 : f32 to vector<8x128xf32>
    %160 = arith.maximumf %158, %159 : vector<8x128xf32>
    %161 = arith.addf %136, %160 : vector<8x128xf32>
    %162 = vector.extract_strided_slice %9 {offsets = [0, 0, 6], sizes = [1, 8, 1], strides = [1, 1, 1]} : vector<3x8x16xf32> to vector<1x8x1xf32>
    %163 = vector.shape_cast %162 : vector<1x8x1xf32> to vector<8x1xf32>
    %c0_49 = arith.constant 0 : index
    %c0_50 = arith.constant 0 : index
    %164 = vector.load %arg5[%c0_49, %c0_50] : memref<3x128xf32, #tpu.memory_space<vmem>>, vector<1x128xf32>
    %165 = vector.broadcast %163 : vector<8x1xf32> to vector<8x128xf32>
    %166 = vector.broadcast %164 : vector<1x128xf32> to vector<8x128xf32>
    %167 = arith.mulf %165, %166 : vector<8x128xf32>
    %168 = vector.broadcast %10 : vector<1x128xf32> to vector<8x128xf32>
    %169 = arith.addf %168, %167 : vector<8x128xf32>
    %170 = vector.extract_strided_slice %9 {offsets = [1, 0, 6], sizes = [1, 8, 1], strides = [1, 1, 1]} : vector<3x8x16xf32> to vector<1x8x1xf32>
    %171 = vector.shape_cast %170 : vector<1x8x1xf32> to vector<8x1xf32>
    %c1_51 = arith.constant 1 : index
    %c0_52 = arith.constant 0 : index
    %172 = vector.load %arg5[%c1_51, %c0_52] : memref<3x128xf32, #tpu.memory_space<vmem>>, vector<1x128xf32>
    %173 = vector.broadcast %171 : vector<8x1xf32> to vector<8x128xf32>
    %174 = vector.broadcast %172 : vector<1x128xf32> to vector<8x128xf32>
    %175 = arith.mulf %173, %174 : vector<8x128xf32>
    %176 = arith.addf %169, %175 : vector<8x128xf32>
    %177 = vector.extract_strided_slice %9 {offsets = [2, 0, 6], sizes = [1, 8, 1], strides = [1, 1, 1]} : vector<3x8x16xf32> to vector<1x8x1xf32>
    %178 = vector.shape_cast %177 : vector<1x8x1xf32> to vector<8x1xf32>
    %c2_53 = arith.constant 2 : index
    %c0_54 = arith.constant 0 : index
    %179 = vector.load %arg5[%c2_53, %c0_54] : memref<3x128xf32, #tpu.memory_space<vmem>>, vector<1x128xf32>
    %180 = vector.broadcast %178 : vector<8x1xf32> to vector<8x128xf32>
    %181 = vector.broadcast %179 : vector<1x128xf32> to vector<8x128xf32>
    %182 = arith.mulf %180, %181 : vector<8x128xf32>
    %183 = arith.addf %176, %182 : vector<8x128xf32>
    %cst_55 = arith.constant 0.000000e+00 : f32
    %184 = vector.broadcast %cst_55 : f32 to vector<8x128xf32>
    %185 = arith.maximumf %183, %184 : vector<8x128xf32>
    %186 = arith.addf %161, %185 : vector<8x128xf32>
    %187 = vector.extract_strided_slice %9 {offsets = [0, 0, 7], sizes = [1, 8, 1], strides = [1, 1, 1]} : vector<3x8x16xf32> to vector<1x8x1xf32>
    %188 = vector.shape_cast %187 : vector<1x8x1xf32> to vector<8x1xf32>
    %c0_56 = arith.constant 0 : index
    %c0_57 = arith.constant 0 : index
    %189 = vector.load %arg5[%c0_56, %c0_57] : memref<3x128xf32, #tpu.memory_space<vmem>>, vector<1x128xf32>
    %190 = vector.broadcast %188 : vector<8x1xf32> to vector<8x128xf32>
    %191 = vector.broadcast %189 : vector<1x128xf32> to vector<8x128xf32>
    %192 = arith.mulf %190, %191 : vector<8x128xf32>
    %193 = vector.broadcast %10 : vector<1x128xf32> to vector<8x128xf32>
    %194 = arith.addf %193, %192 : vector<8x128xf32>
    %195 = vector.extract_strided_slice %9 {offsets = [1, 0, 7], sizes = [1, 8, 1], strides = [1, 1, 1]} : vector<3x8x16xf32> to vector<1x8x1xf32>
    %196 = vector.shape_cast %195 : vector<1x8x1xf32> to vector<8x1xf32>
    %c1_58 = arith.constant 1 : index
    %c0_59 = arith.constant 0 : index
    %197 = vector.load %arg5[%c1_58, %c0_59] : memref<3x128xf32, #tpu.memory_space<vmem>>, vector<1x128xf32>
    %198 = vector.broadcast %196 : vector<8x1xf32> to vector<8x128xf32>
    %199 = vector.broadcast %197 : vector<1x128xf32> to vector<8x128xf32>
    %200 = arith.mulf %198, %199 : vector<8x128xf32>
    %201 = arith.addf %194, %200 : vector<8x128xf32>
    %202 = vector.extract_strided_slice %9 {offsets = [2, 0, 7], sizes = [1, 8, 1], strides = [1, 1, 1]} : vector<3x8x16xf32> to vector<1x8x1xf32>
    %203 = vector.shape_cast %202 : vector<1x8x1xf32> to vector<8x1xf32>
    %c2_60 = arith.constant 2 : index
    %c0_61 = arith.constant 0 : index
    %204 = vector.load %arg5[%c2_60, %c0_61] : memref<3x128xf32, #tpu.memory_space<vmem>>, vector<1x128xf32>
    %205 = vector.broadcast %203 : vector<8x1xf32> to vector<8x128xf32>
    %206 = vector.broadcast %204 : vector<1x128xf32> to vector<8x128xf32>
    %207 = arith.mulf %205, %206 : vector<8x128xf32>
    %208 = arith.addf %201, %207 : vector<8x128xf32>
    %cst_62 = arith.constant 0.000000e+00 : f32
    %209 = vector.broadcast %cst_62 : f32 to vector<8x128xf32>
    %210 = arith.maximumf %208, %209 : vector<8x128xf32>
    %211 = arith.addf %186, %210 : vector<8x128xf32>
    %212 = vector.extract_strided_slice %9 {offsets = [0, 0, 8], sizes = [1, 8, 1], strides = [1, 1, 1]} : vector<3x8x16xf32> to vector<1x8x1xf32>
    %213 = vector.shape_cast %212 : vector<1x8x1xf32> to vector<8x1xf32>
    %c0_63 = arith.constant 0 : index
    %c0_64 = arith.constant 0 : index
    %214 = vector.load %arg5[%c0_63, %c0_64] : memref<3x128xf32, #tpu.memory_space<vmem>>, vector<1x128xf32>
    %215 = vector.broadcast %213 : vector<8x1xf32> to vector<8x128xf32>
    %216 = vector.broadcast %214 : vector<1x128xf32> to vector<8x128xf32>
    %217 = arith.mulf %215, %216 : vector<8x128xf32>
    %218 = vector.broadcast %10 : vector<1x128xf32> to vector<8x128xf32>
    %219 = arith.addf %218, %217 : vector<8x128xf32>
    %220 = vector.extract_strided_slice %9 {offsets = [1, 0, 8], sizes = [1, 8, 1], strides = [1, 1, 1]} : vector<3x8x16xf32> to vector<1x8x1xf32>
    %221 = vector.shape_cast %220 : vector<1x8x1xf32> to vector<8x1xf32>
    %c1_65 = arith.constant 1 : index
    %c0_66 = arith.constant 0 : index
    %222 = vector.load %arg5[%c1_65, %c0_66] : memref<3x128xf32, #tpu.memory_space<vmem>>, vector<1x128xf32>
    %223 = vector.broadcast %221 : vector<8x1xf32> to vector<8x128xf32>
    %224 = vector.broadcast %222 : vector<1x128xf32> to vector<8x128xf32>
    %225 = arith.mulf %223, %224 : vector<8x128xf32>
    %226 = arith.addf %219, %225 : vector<8x128xf32>
    %227 = vector.extract_strided_slice %9 {offsets = [2, 0, 8], sizes = [1, 8, 1], strides = [1, 1, 1]} : vector<3x8x16xf32> to vector<1x8x1xf32>
    %228 = vector.shape_cast %227 : vector<1x8x1xf32> to vector<8x1xf32>
    %c2_67 = arith.constant 2 : index
    %c0_68 = arith.constant 0 : index
    %229 = vector.load %arg5[%c2_67, %c0_68] : memref<3x128xf32, #tpu.memory_space<vmem>>, vector<1x128xf32>
    %230 = vector.broadcast %228 : vector<8x1xf32> to vector<8x128xf32>
    %231 = vector.broadcast %229 : vector<1x128xf32> to vector<8x128xf32>
    %232 = arith.mulf %230, %231 : vector<8x128xf32>
    %233 = arith.addf %226, %232 : vector<8x128xf32>
    %cst_69 = arith.constant 0.000000e+00 : f32
    %234 = vector.broadcast %cst_69 : f32 to vector<8x128xf32>
    %235 = arith.maximumf %233, %234 : vector<8x128xf32>
    %236 = arith.addf %211, %235 : vector<8x128xf32>
    %237 = vector.extract_strided_slice %9 {offsets = [0, 0, 9], sizes = [1, 8, 1], strides = [1, 1, 1]} : vector<3x8x16xf32> to vector<1x8x1xf32>
    %238 = vector.shape_cast %237 : vector<1x8x1xf32> to vector<8x1xf32>
    %c0_70 = arith.constant 0 : index
    %c0_71 = arith.constant 0 : index
    %239 = vector.load %arg5[%c0_70, %c0_71] : memref<3x128xf32, #tpu.memory_space<vmem>>, vector<1x128xf32>
    %240 = vector.broadcast %238 : vector<8x1xf32> to vector<8x128xf32>
    %241 = vector.broadcast %239 : vector<1x128xf32> to vector<8x128xf32>
    %242 = arith.mulf %240, %241 : vector<8x128xf32>
    %243 = vector.broadcast %10 : vector<1x128xf32> to vector<8x128xf32>
    %244 = arith.addf %243, %242 : vector<8x128xf32>
    %245 = vector.extract_strided_slice %9 {offsets = [1, 0, 9], sizes = [1, 8, 1], strides = [1, 1, 1]} : vector<3x8x16xf32> to vector<1x8x1xf32>
    %246 = vector.shape_cast %245 : vector<1x8x1xf32> to vector<8x1xf32>
    %c1_72 = arith.constant 1 : index
    %c0_73 = arith.constant 0 : index
    %247 = vector.load %arg5[%c1_72, %c0_73] : memref<3x128xf32, #tpu.memory_space<vmem>>, vector<1x128xf32>
    %248 = vector.broadcast %246 : vector<8x1xf32> to vector<8x128xf32>
    %249 = vector.broadcast %247 : vector<1x128xf32> to vector<8x128xf32>
    %250 = arith.mulf %248, %249 : vector<8x128xf32>
    %251 = arith.addf %244, %250 : vector<8x128xf32>
    %252 = vector.extract_strided_slice %9 {offsets = [2, 0, 9], sizes = [1, 8, 1], strides = [1, 1, 1]} : vector<3x8x16xf32> to vector<1x8x1xf32>
    %253 = vector.shape_cast %252 : vector<1x8x1xf32> to vector<8x1xf32>
    %c2_74 = arith.constant 2 : index
    %c0_75 = arith.constant 0 : index
    %254 = vector.load %arg5[%c2_74, %c0_75] : memref<3x128xf32, #tpu.memory_space<vmem>>, vector<1x128xf32>
    %255 = vector.broadcast %253 : vector<8x1xf32> to vector<8x128xf32>
    %256 = vector.broadcast %254 : vector<1x128xf32> to vector<8x128xf32>
    %257 = arith.mulf %255, %256 : vector<8x128xf32>
    %258 = arith.addf %251, %257 : vector<8x128xf32>
    %cst_76 = arith.constant 0.000000e+00 : f32
    %259 = vector.broadcast %cst_76 : f32 to vector<8x128xf32>
    %260 = arith.maximumf %258, %259 : vector<8x128xf32>
    %261 = arith.addf %236, %260 : vector<8x128xf32>
    %262 = vector.extract_strided_slice %9 {offsets = [0, 0, 10], sizes = [1, 8, 1], strides = [1, 1, 1]} : vector<3x8x16xf32> to vector<1x8x1xf32>
    %263 = vector.shape_cast %262 : vector<1x8x1xf32> to vector<8x1xf32>
    %c0_77 = arith.constant 0 : index
    %c0_78 = arith.constant 0 : index
    %264 = vector.load %arg5[%c0_77, %c0_78] : memref<3x128xf32, #tpu.memory_space<vmem>>, vector<1x128xf32>
    %265 = vector.broadcast %263 : vector<8x1xf32> to vector<8x128xf32>
    %266 = vector.broadcast %264 : vector<1x128xf32> to vector<8x128xf32>
    %267 = arith.mulf %265, %266 : vector<8x128xf32>
    %268 = vector.broadcast %10 : vector<1x128xf32> to vector<8x128xf32>
    %269 = arith.addf %268, %267 : vector<8x128xf32>
    %270 = vector.extract_strided_slice %9 {offsets = [1, 0, 10], sizes = [1, 8, 1], strides = [1, 1, 1]} : vector<3x8x16xf32> to vector<1x8x1xf32>
    %271 = vector.shape_cast %270 : vector<1x8x1xf32> to vector<8x1xf32>
    %c1_79 = arith.constant 1 : index
    %c0_80 = arith.constant 0 : index
    %272 = vector.load %arg5[%c1_79, %c0_80] : memref<3x128xf32, #tpu.memory_space<vmem>>, vector<1x128xf32>
    %273 = vector.broadcast %271 : vector<8x1xf32> to vector<8x128xf32>
    %274 = vector.broadcast %272 : vector<1x128xf32> to vector<8x128xf32>
    %275 = arith.mulf %273, %274 : vector<8x128xf32>
    %276 = arith.addf %269, %275 : vector<8x128xf32>
    %277 = vector.extract_strided_slice %9 {offsets = [2, 0, 10], sizes = [1, 8, 1], strides = [1, 1, 1]} : vector<3x8x16xf32> to vector<1x8x1xf32>
    %278 = vector.shape_cast %277 : vector<1x8x1xf32> to vector<8x1xf32>
    %c2_81 = arith.constant 2 : index
    %c0_82 = arith.constant 0 : index
    %279 = vector.load %arg5[%c2_81, %c0_82] : memref<3x128xf32, #tpu.memory_space<vmem>>, vector<1x128xf32>
    %280 = vector.broadcast %278 : vector<8x1xf32> to vector<8x128xf32>
    %281 = vector.broadcast %279 : vector<1x128xf32> to vector<8x128xf32>
    %282 = arith.mulf %280, %281 : vector<8x128xf32>
    %283 = arith.addf %276, %282 : vector<8x128xf32>
    %cst_83 = arith.constant 0.000000e+00 : f32
    %284 = vector.broadcast %cst_83 : f32 to vector<8x128xf32>
    %285 = arith.maximumf %283, %284 : vector<8x128xf32>
    %286 = arith.addf %261, %285 : vector<8x128xf32>
    %287 = vector.extract_strided_slice %9 {offsets = [0, 0, 11], sizes = [1, 8, 1], strides = [1, 1, 1]} : vector<3x8x16xf32> to vector<1x8x1xf32>
    %288 = vector.shape_cast %287 : vector<1x8x1xf32> to vector<8x1xf32>
    %c0_84 = arith.constant 0 : index
    %c0_85 = arith.constant 0 : index
    %289 = vector.load %arg5[%c0_84, %c0_85] : memref<3x128xf32, #tpu.memory_space<vmem>>, vector<1x128xf32>
    %290 = vector.broadcast %288 : vector<8x1xf32> to vector<8x128xf32>
    %291 = vector.broadcast %289 : vector<1x128xf32> to vector<8x128xf32>
    %292 = arith.mulf %290, %291 : vector<8x128xf32>
    %293 = vector.broadcast %10 : vector<1x128xf32> to vector<8x128xf32>
    %294 = arith.addf %293, %292 : vector<8x128xf32>
    %295 = vector.extract_strided_slice %9 {offsets = [1, 0, 11], sizes = [1, 8, 1], strides = [1, 1, 1]} : vector<3x8x16xf32> to vector<1x8x1xf32>
    %296 = vector.shape_cast %295 : vector<1x8x1xf32> to vector<8x1xf32>
    %c1_86 = arith.constant 1 : index
    %c0_87 = arith.constant 0 : index
    %297 = vector.load %arg5[%c1_86, %c0_87] : memref<3x128xf32, #tpu.memory_space<vmem>>, vector<1x128xf32>
    %298 = vector.broadcast %296 : vector<8x1xf32> to vector<8x128xf32>
    %299 = vector.broadcast %297 : vector<1x128xf32> to vector<8x128xf32>
    %300 = arith.mulf %298, %299 : vector<8x128xf32>
    %301 = arith.addf %294, %300 : vector<8x128xf32>
    %302 = vector.extract_strided_slice %9 {offsets = [2, 0, 11], sizes = [1, 8, 1], strides = [1, 1, 1]} : vector<3x8x16xf32> to vector<1x8x1xf32>
    %303 = vector.shape_cast %302 : vector<1x8x1xf32> to vector<8x1xf32>
    %c2_88 = arith.constant 2 : index
    %c0_89 = arith.constant 0 : index
    %304 = vector.load %arg5[%c2_88, %c0_89] : memref<3x128xf32, #tpu.memory_space<vmem>>, vector<1x128xf32>
    %305 = vector.broadcast %303 : vector<8x1xf32> to vector<8x128xf32>
    %306 = vector.broadcast %304 : vector<1x128xf32> to vector<8x128xf32>
    %307 = arith.mulf %305, %306 : vector<8x128xf32>
    %308 = arith.addf %301, %307 : vector<8x128xf32>
    %cst_90 = arith.constant 0.000000e+00 : f32
    %309 = vector.broadcast %cst_90 : f32 to vector<8x128xf32>
    %310 = arith.maximumf %308, %309 : vector<8x128xf32>
    %311 = arith.addf %286, %310 : vector<8x128xf32>
    %312 = vector.extract_strided_slice %9 {offsets = [0, 0, 12], sizes = [1, 8, 1], strides = [1, 1, 1]} : vector<3x8x16xf32> to vector<1x8x1xf32>
    %313 = vector.shape_cast %312 : vector<1x8x1xf32> to vector<8x1xf32>
    %c0_91 = arith.constant 0 : index
    %c0_92 = arith.constant 0 : index
    %314 = vector.load %arg5[%c0_91, %c0_92] : memref<3x128xf32, #tpu.memory_space<vmem>>, vector<1x128xf32>
    %315 = vector.broadcast %313 : vector<8x1xf32> to vector<8x128xf32>
    %316 = vector.broadcast %314 : vector<1x128xf32> to vector<8x128xf32>
    %317 = arith.mulf %315, %316 : vector<8x128xf32>
    %318 = vector.broadcast %10 : vector<1x128xf32> to vector<8x128xf32>
    %319 = arith.addf %318, %317 : vector<8x128xf32>
    %320 = vector.extract_strided_slice %9 {offsets = [1, 0, 12], sizes = [1, 8, 1], strides = [1, 1, 1]} : vector<3x8x16xf32> to vector<1x8x1xf32>
    %321 = vector.shape_cast %320 : vector<1x8x1xf32> to vector<8x1xf32>
    %c1_93 = arith.constant 1 : index
    %c0_94 = arith.constant 0 : index
    %322 = vector.load %arg5[%c1_93, %c0_94] : memref<3x128xf32, #tpu.memory_space<vmem>>, vector<1x128xf32>
    %323 = vector.broadcast %321 : vector<8x1xf32> to vector<8x128xf32>
    %324 = vector.broadcast %322 : vector<1x128xf32> to vector<8x128xf32>
    %325 = arith.mulf %323, %324 : vector<8x128xf32>
    %326 = arith.addf %319, %325 : vector<8x128xf32>
    %327 = vector.extract_strided_slice %9 {offsets = [2, 0, 12], sizes = [1, 8, 1], strides = [1, 1, 1]} : vector<3x8x16xf32> to vector<1x8x1xf32>
    %328 = vector.shape_cast %327 : vector<1x8x1xf32> to vector<8x1xf32>
    %c2_95 = arith.constant 2 : index
    %c0_96 = arith.constant 0 : index
    %329 = vector.load %arg5[%c2_95, %c0_96] : memref<3x128xf32, #tpu.memory_space<vmem>>, vector<1x128xf32>
    %330 = vector.broadcast %328 : vector<8x1xf32> to vector<8x128xf32>
    %331 = vector.broadcast %329 : vector<1x128xf32> to vector<8x128xf32>
    %332 = arith.mulf %330, %331 : vector<8x128xf32>
    %333 = arith.addf %326, %332 : vector<8x128xf32>
    %cst_97 = arith.constant 0.000000e+00 : f32
    %334 = vector.broadcast %cst_97 : f32 to vector<8x128xf32>
    %335 = arith.maximumf %333, %334 : vector<8x128xf32>
    %336 = arith.addf %311, %335 : vector<8x128xf32>
    %337 = vector.extract_strided_slice %9 {offsets = [0, 0, 13], sizes = [1, 8, 1], strides = [1, 1, 1]} : vector<3x8x16xf32> to vector<1x8x1xf32>
    %338 = vector.shape_cast %337 : vector<1x8x1xf32> to vector<8x1xf32>
    %c0_98 = arith.constant 0 : index
    %c0_99 = arith.constant 0 : index
    %339 = vector.load %arg5[%c0_98, %c0_99] : memref<3x128xf32, #tpu.memory_space<vmem>>, vector<1x128xf32>
    %340 = vector.broadcast %338 : vector<8x1xf32> to vector<8x128xf32>
    %341 = vector.broadcast %339 : vector<1x128xf32> to vector<8x128xf32>
    %342 = arith.mulf %340, %341 : vector<8x128xf32>
    %343 = vector.broadcast %10 : vector<1x128xf32> to vector<8x128xf32>
    %344 = arith.addf %343, %342 : vector<8x128xf32>
    %345 = vector.extract_strided_slice %9 {offsets = [1, 0, 13], sizes = [1, 8, 1], strides = [1, 1, 1]} : vector<3x8x16xf32> to vector<1x8x1xf32>
    %346 = vector.shape_cast %345 : vector<1x8x1xf32> to vector<8x1xf32>
    %c1_100 = arith.constant 1 : index
    %c0_101 = arith.constant 0 : index
    %347 = vector.load %arg5[%c1_100, %c0_101] : memref<3x128xf32, #tpu.memory_space<vmem>>, vector<1x128xf32>
    %348 = vector.broadcast %346 : vector<8x1xf32> to vector<8x128xf32>
    %349 = vector.broadcast %347 : vector<1x128xf32> to vector<8x128xf32>
    %350 = arith.mulf %348, %349 : vector<8x128xf32>
    %351 = arith.addf %344, %350 : vector<8x128xf32>
    %352 = vector.extract_strided_slice %9 {offsets = [2, 0, 13], sizes = [1, 8, 1], strides = [1, 1, 1]} : vector<3x8x16xf32> to vector<1x8x1xf32>
    %353 = vector.shape_cast %352 : vector<1x8x1xf32> to vector<8x1xf32>
    %c2_102 = arith.constant 2 : index
    %c0_103 = arith.constant 0 : index
    %354 = vector.load %arg5[%c2_102, %c0_103] : memref<3x128xf32, #tpu.memory_space<vmem>>, vector<1x128xf32>
    %355 = vector.broadcast %353 : vector<8x1xf32> to vector<8x128xf32>
    %356 = vector.broadcast %354 : vector<1x128xf32> to vector<8x128xf32>
    %357 = arith.mulf %355, %356 : vector<8x128xf32>
    %358 = arith.addf %351, %357 : vector<8x128xf32>
    %cst_104 = arith.constant 0.000000e+00 : f32
    %359 = vector.broadcast %cst_104 : f32 to vector<8x128xf32>
    %360 = arith.maximumf %358, %359 : vector<8x128xf32>
    %361 = arith.addf %336, %360 : vector<8x128xf32>
    %362 = vector.extract_strided_slice %9 {offsets = [0, 0, 14], sizes = [1, 8, 1], strides = [1, 1, 1]} : vector<3x8x16xf32> to vector<1x8x1xf32>
    %363 = vector.shape_cast %362 : vector<1x8x1xf32> to vector<8x1xf32>
    %c0_105 = arith.constant 0 : index
    %c0_106 = arith.constant 0 : index
    %364 = vector.load %arg5[%c0_105, %c0_106] : memref<3x128xf32, #tpu.memory_space<vmem>>, vector<1x128xf32>
    %365 = vector.broadcast %363 : vector<8x1xf32> to vector<8x128xf32>
    %366 = vector.broadcast %364 : vector<1x128xf32> to vector<8x128xf32>
    %367 = arith.mulf %365, %366 : vector<8x128xf32>
    %368 = vector.broadcast %10 : vector<1x128xf32> to vector<8x128xf32>
    %369 = arith.addf %368, %367 : vector<8x128xf32>
    %370 = vector.extract_strided_slice %9 {offsets = [1, 0, 14], sizes = [1, 8, 1], strides = [1, 1, 1]} : vector<3x8x16xf32> to vector<1x8x1xf32>
    %371 = vector.shape_cast %370 : vector<1x8x1xf32> to vector<8x1xf32>
    %c1_107 = arith.constant 1 : index
    %c0_108 = arith.constant 0 : index
    %372 = vector.load %arg5[%c1_107, %c0_108] : memref<3x128xf32, #tpu.memory_space<vmem>>, vector<1x128xf32>
    %373 = vector.broadcast %371 : vector<8x1xf32> to vector<8x128xf32>
    %374 = vector.broadcast %372 : vector<1x128xf32> to vector<8x128xf32>
    %375 = arith.mulf %373, %374 : vector<8x128xf32>
    %376 = arith.addf %369, %375 : vector<8x128xf32>
    %377 = vector.extract_strided_slice %9 {offsets = [2, 0, 14], sizes = [1, 8, 1], strides = [1, 1, 1]} : vector<3x8x16xf32> to vector<1x8x1xf32>
    %378 = vector.shape_cast %377 : vector<1x8x1xf32> to vector<8x1xf32>
    %c2_109 = arith.constant 2 : index
    %c0_110 = arith.constant 0 : index
    %379 = vector.load %arg5[%c2_109, %c0_110] : memref<3x128xf32, #tpu.memory_space<vmem>>, vector<1x128xf32>
    %380 = vector.broadcast %378 : vector<8x1xf32> to vector<8x128xf32>
    %381 = vector.broadcast %379 : vector<1x128xf32> to vector<8x128xf32>
    %382 = arith.mulf %380, %381 : vector<8x128xf32>
    %383 = arith.addf %376, %382 : vector<8x128xf32>
    %cst_111 = arith.constant 0.000000e+00 : f32
    %384 = vector.broadcast %cst_111 : f32 to vector<8x128xf32>
    %385 = arith.maximumf %383, %384 : vector<8x128xf32>
    %386 = arith.addf %361, %385 : vector<8x128xf32>
    %387 = vector.extract_strided_slice %9 {offsets = [0, 0, 15], sizes = [1, 8, 1], strides = [1, 1, 1]} : vector<3x8x16xf32> to vector<1x8x1xf32>
    %388 = vector.shape_cast %387 : vector<1x8x1xf32> to vector<8x1xf32>
    %c0_112 = arith.constant 0 : index
    %c0_113 = arith.constant 0 : index
    %389 = vector.load %arg5[%c0_112, %c0_113] : memref<3x128xf32, #tpu.memory_space<vmem>>, vector<1x128xf32>
    %390 = vector.broadcast %388 : vector<8x1xf32> to vector<8x128xf32>
    %391 = vector.broadcast %389 : vector<1x128xf32> to vector<8x128xf32>
    %392 = arith.mulf %390, %391 : vector<8x128xf32>
    %393 = vector.broadcast %10 : vector<1x128xf32> to vector<8x128xf32>
    %394 = arith.addf %393, %392 : vector<8x128xf32>
    %395 = vector.extract_strided_slice %9 {offsets = [1, 0, 15], sizes = [1, 8, 1], strides = [1, 1, 1]} : vector<3x8x16xf32> to vector<1x8x1xf32>
    %396 = vector.shape_cast %395 : vector<1x8x1xf32> to vector<8x1xf32>
    %c1_114 = arith.constant 1 : index
    %c0_115 = arith.constant 0 : index
    %397 = vector.load %arg5[%c1_114, %c0_115] : memref<3x128xf32, #tpu.memory_space<vmem>>, vector<1x128xf32>
    %398 = vector.broadcast %396 : vector<8x1xf32> to vector<8x128xf32>
    %399 = vector.broadcast %397 : vector<1x128xf32> to vector<8x128xf32>
    %400 = arith.mulf %398, %399 : vector<8x128xf32>
    %401 = arith.addf %394, %400 : vector<8x128xf32>
    %402 = vector.extract_strided_slice %9 {offsets = [2, 0, 15], sizes = [1, 8, 1], strides = [1, 1, 1]} : vector<3x8x16xf32> to vector<1x8x1xf32>
    %403 = vector.shape_cast %402 : vector<1x8x1xf32> to vector<8x1xf32>
    %c2_116 = arith.constant 2 : index
    %c0_117 = arith.constant 0 : index
    %404 = vector.load %arg5[%c2_116, %c0_117] : memref<3x128xf32, #tpu.memory_space<vmem>>, vector<1x128xf32>
    %405 = vector.broadcast %403 : vector<8x1xf32> to vector<8x128xf32>
    %406 = vector.broadcast %404 : vector<1x128xf32> to vector<8x128xf32>
    %407 = arith.mulf %405, %406 : vector<8x128xf32>
    %408 = arith.addf %401, %407 : vector<8x128xf32>
    %cst_118 = arith.constant 0.000000e+00 : f32
    %409 = vector.broadcast %cst_118 : f32 to vector<8x128xf32>
    %410 = arith.maximumf %408, %409 : vector<8x128xf32>
    %411 = arith.addf %386, %410 : vector<8x128xf32>
    %cst_119 = arith.constant 6.250000e-02 : f32
    %412 = vector.broadcast %cst_119 : f32 to vector<8x128xf32>
    %413 = arith.mulf %411, %412 : vector<8x128xf32>
    %c0_120 = arith.constant 0 : index
    %c0_121 = arith.constant 0 : index
    %c0_122 = arith.constant 0 : index
    %414 = vector.load %arg7[%c0_120, %c0_121, %c0_122] : memref<1x8x128xf32, #tpu.memory_space<vmem>>, vector<1x8x128xf32>
    %415 = vector.shape_cast %414 : vector<1x8x128xf32> to vector<8x128xf32>
    %416 = vector.shape_cast %413 : vector<8x128xf32> to vector<1x8x128xf32>
    tpu.vector_store %arg7[%c0_120, %c0_121, %c0_122], %416 {strides = array<i32>} : memref<1x8x128xf32, #tpu.memory_space<vmem>>, vector<1x8x128xf32>,
    return
  }
  func.func @transform_0(%arg0: i32, %arg1: i32) -> (i32, i32, i32, i32) {
    %c0_i32 = arith.constant 0 : i32
    %c0_i32_0 = arith.constant 0 : i32
    %c0_i32_1 = arith.constant 0 : i32
    return %arg0, %c0_i32, %arg1, %c0_i32_0 : i32, i32, i32, i32
  }
  func.func @transform_1(%arg0: i32, %arg1: i32) -> (i32, i32) {
    %c0_i32 = arith.constant 0 : i32
    %c0_i32_0 = arith.constant 0 : i32
    %c0_i32_1 = arith.constant 0 : i32
    return %c0_i32, %c0_i32_0 : i32, i32
  }
  func.func @transform_2(%arg0: i32, %arg1: i32) -> (i32, i32) {
    %c0_i32 = arith.constant 0 : i32
    %c0_i32_0 = arith.constant 0 : i32
    %c0_i32_1 = arith.constant 0 : i32
    return %c0_i32, %c0_i32_0 : i32, i32
  }
  func.func @transform_3(%arg0: i32, %arg1: i32) -> (i32, i32) {
    %c0_i32 = arith.constant 0 : i32
    %c0_i32_0 = arith.constant 0 : i32
    %c0_i32_1 = arith.constant 0 : i32
    return %c0_i32, %c0_i32_0 : i32, i32
  }
  func.func @transform_4(%arg0: i32, %arg1: i32) -> (i32, i32) {
    %c0_i32 = arith.constant 0 : i32
    %c0_i32_0 = arith.constant 0 : i32
    %c0_i32_1 = arith.constant 0 : i32
    return %c0_i32, %c0_i32_0 : i32, i32
  }
  func.func @transform_5(%arg0: i32, %arg1: i32) -> (i32, i32, i32) {
    %c0_i32 = arith.constant 0 : i32
    %c0_i32_0 = arith.constant 0 : i32
    return %arg0, %arg1, %c0_i32 : i32, i32, i32
  }
}

</mosaic_0001>

<llo_original>
// kernel: tpu_custom_call.1
$region0: #{tpu_custom_call.1}
  #allocation0 [shape = 'u32[]', space=smem, size = 0x4, offset = 0x4, fixed_abs, tag = 'smem constant byte address 0x4 - core index']
  #allocation1 [shape = 'u32[144,128]{1,0:T(1,128)}', space=vmem, size = 0x12000, scoped, tag = 'internal scratch']
  %s0 = inlined_call_operand.hbm [shape: f32[2,3,16,16], index: 0, kind: input, shape index: {}]
  %s1 = inlined_call_operand.vmem [shape: f32[1,16], index: 1, kind: input, shape index: {}]
  %s2 = inlined_call_operand.vmem [shape: f32[1,16], index: 2, kind: input, shape index: {}]
  %s3 = inlined_call_operand.vmem [shape: f32[3,128], index: 3, kind: input, shape index: {}]
  %s4 = inlined_call_operand.vmem [shape: f32[1,128], index: 4, kind: input, shape index: {}]
  %s5 = inlined_call_operand.hbm [shape: f32[2,16,128], index: 5, kind: output, shape index: {}]
  %s6 = sld [smem:[#allocation0]]
  $region57: #{tpu_custom_call.1} parent=0
    _
  %s8 = ssub.s32 1, %s6
  %s9 = scalar_select 0, %s8, %s6
  $region1: #{tpu_custom_call.1} parent=0
    #allocation2 [shape = 'u8[24576]{0}', space=vmem, size = 0x6000, scoped, tag = 'input window, operand 0']
    #allocation3 [shape = 's32[2]{0}', space=sflag, size = 0x8, scoped, tag = 'scoped memory for tpu_custom_call.1']
    #allocation4 [shape = 's32[2]{0}', space=sflag, size = 0x8, scoped, tag = 'scoped memory for tpu_custom_call.1']
    #allocation5 [shape = 'u8[8192]{0}', space=vmem, size = 0x2000, scoped, tag = 'output window, operand 0']
    %10 = vsyncpa [#allocation3], 0
    %s11 = scalar_lea.sflag [#allocation3], 1
    %12 = vsyncpa %s11, 0
    %13 = vsyncpa [#allocation4], 0
    %s14 = scalar_lea.sflag [#allocation4], 1
    %15 = vsyncpa %s14, 0
    loop: start=0, step=1, limit=6
    $region2: #{tpu_custom_call.1} parent=1 // loop_pre_header
      _
    $region3: #{tpu_custom_call.1} parent=1 // loop_header
      %s17 = sphi 0, %s21
      %p18 = scmp.ge.s32.totalorder %s17, 6
      %s24 = sphi 0, %s36
      %s25 = sphi 0, %s32
      %s26 = sphi 0, %s24
      %s27 = sphi 0, %s25
      %s28 = sphi 0, %s26
      %s29 = sphi 0, %s27
      %s41 = sphi 0, %s43
      %s44 = sphi 0, %s41
      %s45 = sphi 0, %s44
      %s61 = sphi 0, %s45
      %s65 = sphi 0, %s65
      %s67 = sphi 0, %s65
      %s68 = sphi 0, %s67
      %s82 = sphi 0, %s68
      %s86 = sphi 0, %s86
      %s88 = sphi 0, %s86
      %s89 = sphi 0, %s88
      %s103 = sphi 0, %s89
      %s107 = sphi 0, %s107
      %s109 = sphi 0, %s107
      %s110 = sphi 0, %s109
      %s124 = sphi 0, %s110
      %s128 = sphi 0, %s128
      %s130 = sphi 0, %s128
      %s131 = sphi 0, %s130
      %s145 = sphi 0, %s131
      %s153 = sphi 0, %s155
      %s156 = sphi 0, %s153
      %s157 = sphi 0, %s156
      %s173 = sphi 0, %s157
    $region4: #{tpu_custom_call.1} parent=1 // loop_header_branch
      %20 = sbr.rel (%p18) target = $region8
    $region5: #{tpu_custom_call.1} parent=1 // loop_body
      %s22 = ssub.s32 %s17, 1
      %s23 = ssub.s32 %s17, 2
      %s30 = sadd.s32 1, %s25
      %p31 = scmp.ge.s32.totalorder %s30, 2
      %s32 = scalar_select %p31, 0, %s30
      %s33 = sadd.s32 1, %s24
      %s34 = scalar_select %p31, %s33, %s24
      %p35 = scmp.ge.s32.totalorder %s34, 2
      %s36 = scalar_select %p35, 0, %s34
      %s37 = ssub.s32 %s24, %s36
      %s38 = ssub.s32 %s25, %s32
      %s39 = sor.u32 %s37, %s38
      %p40 = scmp.eq.s32.totalorder %s39, 0
      %s42 = sadd.s32 %s41, 1
      %s43 = scalar_select %p40, %s41, %s42
      %p46 = pneg %p40
      %p47 = scmp.eq.s32.totalorder %s17, 3
      %p48 = por %p46, %p47
      %p49 = scmp.ne.s32.totalorder %s41, %s44
      %p50 = scmp.eq.s32.totalorder %s17, 0
      %p51 = por %p49, %p50
      %p52 = scmp.ne.s32.totalorder %s41, %s44
      %p53 = scmp.eq.s32.totalorder %s22, 3
      %p54 = por %p52, %p53
      %p55 = scmp.ne.s32.totalorder %s44, %s45
      %p56 = scmp.eq.s32.totalorder %s22, 0
      %p57 = por %p55, %p56
      %p58 = scmp.ne.s32.totalorder %s44, %s45
      %p59 = scmp.eq.s32.totalorder %s23, 3
      %p60 = por %p58, %p59
      %p62 = scmp.ne.s32.totalorder %s45, %s61
      %p63 = scmp.eq.s32.totalorder %s23, 0
      %p64 = por %p62, %p63
      %s66 = sadd.s32 %s65, 1
      %p69 = scmp.eq.s32.totalorder %s17, 3
      %p70 = scmp.ne.s32.totalorder %s65, %s67
      %p71 = scmp.eq.s32.totalorder %s17, 0
      %p72 = por %p70, %p71
      %p73 = scmp.ne.s32.totalorder %s65, %s67
      %p74 = scmp.eq.s32.totalorder %s22, 3
      %p75 = por %p73, %p74
      %p76 = scmp.ne.s32.totalorder %s67, %s68
      %p77 = scmp.eq.s32.totalorder %s22, 0
      %p78 = por %p76, %p77
      %p79 = scmp.ne.s32.totalorder %s67, %s68
      %p80 = scmp.eq.s32.totalorder %s23, 3
      %p81 = por %p79, %p80
      %p83 = scmp.ne.s32.totalorder %s68, %s82
      %p84 = scmp.eq.s32.totalorder %s23, 0
      %p85 = por %p83, %p84
      %s87 = sadd.s32 %s86, 1
      %p90 = scmp.eq.s32.totalorder %s17, 3
      %p91 = scmp.ne.s32.totalorder %s86, %s88
      %p92 = scmp.eq.s32.totalorder %s17, 0
      %p93 = por %p91, %p92
      %p94 = scmp.ne.s32.totalorder %s86, %s88
      %p95 = scmp.eq.s32.totalorder %s22, 3
      %p96 = por %p94, %p95
      %p97 = scmp.ne.s32.totalorder %s88, %s89
      %p98 = scmp.eq.s32.totalorder %s22, 0
      %p99 = por %p97, %p98
      %p100 = scmp.ne.s32.totalorder %s88, %s89
      %p101 = scmp.eq.s32.totalorder %s23, 3
      %p102 = por %p100, %p101
      %p104 = scmp.ne.s32.totalorder %s89, %s103
      %p105 = scmp.eq.s32.totalorder %s23, 0
      %p106 = por %p104, %p105
      %s108 = sadd.s32 %s107, 1
      %p111 = scmp.eq.s32.totalorder %s17, 3
      %p112 = scmp.ne.s32.totalorder %s107, %s109
      %p113 = scmp.eq.s32.totalorder %s17, 0
      %p114 = por %p112, %p113
      %p115 = scmp.ne.s32.totalorder %s107, %s109
      %p116 = scmp.eq.s32.totalorder %s22, 3
      %p117 = por %p115, %p116
      %p118 = scmp.ne.s32.totalorder %s109, %s110
      %p119 = scmp.eq.s32.totalorder %s22, 0
      %p120 = por %p118, %p119
      %p121 = scmp.ne.s32.totalorder %s109, %s110
      %p122 = scmp.eq.s32.totalorder %s23, 3
      %p123 = por %p121, %p122
      %p125 = scmp.ne.s32.totalorder %s110, %s124
      %p126 = scmp.eq.s32.totalorder %s23, 0
      %p127 = por %p125, %p126
      %s129 = sadd.s32 %s128, 1
      %p132 = scmp.eq.s32.totalorder %s17, 3
      %p133 = scmp.ne.s32.totalorder %s128, %s130
      %p134 = scmp.eq.s32.totalorder %s17, 0
      %p135 = por %p133, %p134
      %p136 = scmp.ne.s32.totalorder %s128, %s130
      %p137 = scmp.eq.s32.totalorder %s22, 3
      %p138 = por %p136, %p137
      %p139 = scmp.ne.s32.totalorder %s130, %s131
      %p140 = scmp.eq.s32.totalorder %s22, 0
      %p141 = por %p139, %p140
      %p142 = scmp.ne.s32.totalorder %s130, %s131
      %p143 = scmp.eq.s32.totalorder %s23, 3
      %p144 = por %p142, %p143
      %p146 = scmp.ne.s32.totalorder %s131, %s145
      %p147 = scmp.eq.s32.totalorder %s23, 0
      %p148 = por %p146, %p147
      %s149 = ssub.s32 %s24, %s36
      %s150 = ssub.s32 %s25, %s32
      %s151 = sor.u32 %s149, %s150
      %p152 = scmp.eq.s32.totalorder %s151, 0
      %s154 = sadd.s32 %s153, 1
      %s155 = scalar_select %p152, %s153, %s154
      %p158 = pneg %p152
      %p159 = scmp.eq.s32.totalorder %s17, 3
      %p160 = por %p158, %p159
      %p161 = scmp.ne.s32.totalorder %s153, %s156
      %p162 = scmp.eq.s32.totalorder %s17, 0
      %p163 = por %p161, %p162
      %p164 = scmp.ne.s32.totalorder %s153, %s156
      %p165 = scmp.eq.s32.totalorder %s22, 3
      %p166 = por %p164, %p165
      %p167 = scmp.ne.s32.totalorder %s156, %s157
      %p168 = scmp.eq.s32.totalorder %s22, 0
      %p169 = por %p167, %p168
      %p170 = scmp.ne.s32.totalorder %s156, %s157
      %p171 = scmp.eq.s32.totalorder %s23, 3
      %p172 = por %p170, %p171
      %p174 = scmp.ne.s32.totalorder %s157, %s173
      %p175 = scmp.eq.s32.totalorder %s23, 0
      %p176 = por %p174, %p175
      %p177 = scmp.le.s32.totalorder 1, %s17
      %p178 = scmp.lt.s32.totalorder %s17, 5
      %p179 = pnand %p177, %p178
      %p180 = pneg %p179
      // Predicated region
      $region9: #{tpu_custom_call.1} parent=5 // pred_check
        _
      $region10: #{tpu_custom_call.1} parent=5 // pred_check_branch
        %182 = sbr.rel (%p179) target = $region12
      $region11: #{tpu_custom_call.1} parent=5 // pred_region
        %s183 = ssub.s32 %s17, 1
        // Predicated region
        $region13: #{tpu_custom_call.1} parent=11 // pred_check
          %p184 = pneg %p78
        $region14: #{tpu_custom_call.1} parent=11 // pred_check_branch
          %186 = sbr.rel (%p184) target = $region16
        $region15: #{tpu_custom_call.1} parent=11 // pred_region
          _
        $region16: #{tpu_custom_call.1} parent=11 // pred_fallthru
          _
        // Predicated region
        $region17: #{tpu_custom_call.1} parent=11 // pred_check
          %p187 = pneg %p99
        $region18: #{tpu_custom_call.1} parent=11 // pred_check_branch
          %189 = sbr.rel (%p187) target = $region20
        $region19: #{tpu_custom_call.1} parent=11 // pred_region
          _
        $region20: #{tpu_custom_call.1} parent=11 // pred_fallthru
          _
        // Predicated region
        $region21: #{tpu_custom_call.1} parent=11 // pred_check
          %p190 = pneg %p120
        $region22: #{tpu_custom_call.1} parent=11 // pred_check_branch
          %192 = sbr.rel (%p190) target = $region24
        $region23: #{tpu_custom_call.1} parent=11 // pred_region
          _
        $region24: #{tpu_custom_call.1} parent=11 // pred_fallthru
          _
        // Predicated region
        $region25: #{tpu_custom_call.1} parent=11 // pred_check
          %p193 = pneg %p141
        $region26: #{tpu_custom_call.1} parent=11 // pred_check_branch
          %195 = sbr.rel (%p193) target = $region28
        $region27: #{tpu_custom_call.1} parent=11 // pred_region
          _
        $region28: #{tpu_custom_call.1} parent=11 // pred_fallthru
          _
      $region12: #{tpu_custom_call.1} parent=5 // pred_fallthru
        _
      %p196 = scmp.lt.s32.totalorder %s17, 4
      // Predicated region
      $region29: #{tpu_custom_call.1} parent=5 // pred_check
        %p197 = pneg %p196
      $region30: #{tpu_custom_call.1} parent=5 // pred_check_branch
        %199 = sbr.rel (%p197) target = $region32
      $region31: #{tpu_custom_call.1} parent=5 // pred_region
        // Predicated region
        $region33: #{tpu_custom_call.1} parent=31 // pred_check
          %p200 = pneg %p51
        $region34: #{tpu_custom_call.1} parent=31 // pred_check_branch
          %202 = sbr.rel (%p200) target = $region36
        $region35: #{tpu_custom_call.1} parent=31 // pred_region
          %s203 = sand.u32 %s41, 1
          %s204 = scalar_lea.sflag [#allocation3], %s203
          %s205 = sand.u32 %s41, 1
          %s206 = smul.addr %s205, 24
          %s207 = scalar_lea.vmem [#allocation2], %s206
          %s209 = ssub.s32 384, 384
          %210 = vsyncadd %s204, %s209
          %s211 = smul.addr %s24, 6
          %s212 = sadd.s32 %s25, %s211
          %s213 = smul.addr %s212, 128
          %s214 = scalar_lea.hbm %s0, %s213
          %s215 = sshll.u32 %s207, 4
          %s216 = int_to_ptr.vmem [resolvable:$true] %s215
          %221 = dma.hbm_to_vmem [thread:$0]  %s214, 384, %s216, %s204, 256, 128, 8
        $region36: #{tpu_custom_call.1} parent=31 // pred_fallthru
          _
      $region32: #{tpu_custom_call.1} parent=5 // pred_fallthru
        _
      %p222 = scmp.le.s32.totalorder 1, %s17
      %p223 = scmp.lt.s32.totalorder %s17, 5
      %p224 = pnand %p222, %p223
      %p225 = pneg %p224
      // Predicated region
      $region37: #{tpu_custom_call.1} parent=5 // pred_check
        _
      $region38: #{tpu_custom_call.1} parent=5 // pred_check_branch
        %227 = sbr.rel (%p224) target = $region40
      $region39: #{tpu_custom_call.1} parent=5 // pred_region
        %s228 = ssub.s32 %s17, 1
        %s229 = sand.u32 %s44, 1
        %s230 = scalar_lea.sflag [#allocation3], %s229
        %s231 = sand.u32 %s44, 1
        %s232 = smul.addr %s231, 24
        %s233 = scalar_lea.vmem [#allocation2], %s232
        // Predicated region
        $region41: #{tpu_custom_call.1} parent=39 // pred_check
          %p234 = pneg %p57
        $region42: #{tpu_custom_call.1} parent=39 // pred_check_branch
          %236 = sbr.rel (%p234) target = $region44
        $region43: #{tpu_custom_call.1} parent=39 // pred_region
          %237 = dma.done %s230, 384
        $region44: #{tpu_custom_call.1} parent=39 // pred_fallthru
          _
        %s238 = sand.u32 %s44, 1
        %s239 = scalar_lea.sflag [#allocation3], %s238
        %s240 = sand.u32 %s44, 1
        %s241 = smul.addr %s240, 24
        %s242 = scalar_lea.vmem [#allocation2], %s241
        %p243 = pneg %p57
        %p244 = pneg %p54
        %p245 = pneg %p78
        %p246 = pneg %p75
        %p247 = pneg %p99
        %p248 = pneg %p96
        %p249 = pneg %p120
        %p250 = pneg %p117
        %p251 = pneg %p141
        %p252 = pneg %p138
        %p253 = pneg %p169
        %p254 = pneg %p166
        %s255 = sand.u32 %s156, 1
        %s256 = scalar_lea.sflag [#allocation4], %s255
        %s257 = sand.u32 %s156, 1
        %s258 = smul.addr %s257, 8
        %s259 = scalar_lea.vmem [#allocation5], %s258
        %v260 = vld [vmem:[%s233] sm:$0xff]
        %v261 = vld [vmem:[%s233 + $0x8] sm:$0xff]
        %v262 = vld [vmem:[%s233 + $0x10] sm:$0xff]
        %v263 = vld [vmem:[%s1] sm:$0x1]
        %v265 = vlaneseq
        %v266 = vshrl.u32 %v265, 7
        %v267 = vsub.s32 0, %v266
        %v268 = vrot.slane %v263, %v267
        %v270 = vmul.f32 %v260, %v268
        %v271 = vmul.f32 %v261, %v268
        %v272 = vmul.f32 %v262, %v268
        %v273 = vld [vmem:[%s2] sm:$0x1]
        %v275 = vlaneseq
        %v276 = vshrl.u32 %v275, 7
        %v277 = vsub.s32 0, %v276
        %v278 = vrot.slane %v273, %v277
        %v280 = vadd.f32 %v270, %v278
        %v281 = vadd.f32 %v271, %v278
        %v282 = vadd.f32 %v272, %v278
        %v283 = vld [vmem:[%s4] sm:$0x1]
        %v284 = vld [vmem:[%s3] sm:$0x1]
        %286 = vset.pattern.permute.xlu0 0
        %287 = vperm.xlu0 %286, %v280
        %v288 = vpop.permute.xlu0 %287
        %v290 = vlaneseq
        %v291 = vshrl.u32 %v290, 7
        %v292 = vsub.s32 0, %v291
        %v293 = vrot.slane %v284, %v292
        %v294 = vmul.f32 %v288, %v293
        %v296 = vlaneseq
        %v297 = vshrl.u32 %v296, 7
        %v298 = vsub.s32 0, %v297
        %v299 = vrot.slane %v283, %v298
        %v301 = vadd.f32 %v299, %v294
        %v302 = vld [vmem:[%s3 + $0x1] sm:$0x1]
        %304 = vset.pattern.permute.xlu0 0
        %305 = vperm.xlu0 %304, %v281
        %v306 = vpop.permute.xlu0 %305
        %v308 = vlaneseq
        %v309 = vshrl.u32 %v308, 7
        %v310 = vsub.s32 0, %v309
        %v311 = vrot.slane %v302, %v310
        %v312 = vmul.f32 %v306, %v311
        %v313 = vadd.f32 %v301, %v312
        %v314 = vld [vmem:[%s3 + $0x2] sm:$0x1]
        %316 = vset.pattern.permute.xlu0 0
        %317 = vperm.xlu0 %316, %v282
        %v318 = vpop.permute.xlu0 %317
        %v320 = vlaneseq
        %v321 = vshrl.u32 %v320, 7
        %v322 = vsub.s32 0, %v321
        %v323 = vrot.slane %v314, %v322
        %v324 = vmul.f32 %v318, %v323
        %v325 = vadd.f32 %v313, %v324
        %v326 = vmax.f32 %v325, 0.0
        %v327 = vadd.f32 %v326, 0.0
        %328 = vset.pattern.permute.xlu0 1
        %329 = vperm.xlu0 %328, %v280
        %v330 = vpop.permute.xlu0 %329
        %v332 = vmul.f32 %v330, %v293
        %v333 = vadd.f32 %v299, %v332
        %334 = vset.pattern.permute.xlu0 1
        %335 = vperm.xlu0 %334, %v281
        %v336 = vpop.permute.xlu0 %335
        %v338 = vmul.f32 %v336, %v311
        %v339 = vadd.f32 %v333, %v338
        %340 = vset.pattern.permute.xlu0 1
        %341 = vperm.xlu0 %340, %v282
        %v342 = vpop.permute.xlu0 %341
        %v344 = vmul.f32 %v342, %v323
        %v345 = vadd.f32 %v339, %v344
        %v346 = vmax.f32 %v345, 0.0
        %v347 = vadd.f32 %v327, %v346
        %348 = vset.pattern.permute.xlu0 2
        %349 = vperm.xlu0 %348, %v280
        %v350 = vpop.permute.xlu0 %349
        %v352 = vmul.f32 %v350, %v293
        %v353 = vadd.f32 %v299, %v352
        %354 = vset.pattern.permute.xlu0 2
        %355 = vperm.xlu0 %354, %v281
        %v356 = vpop.permute.xlu0 %355
        %v358 = vmul.f32 %v356, %v311
        %v359 = vadd.f32 %v353, %v358
        %360 = vset.pattern.permute.xlu0 2
        %361 = vperm.xlu0 %360, %v282
        %v362 = vpop.permute.xlu0 %361
        %v364 = vmul.f32 %v362, %v323
        %v365 = vadd.f32 %v359, %v364
        %v366 = vmax.f32 %v365, 0.0
        %v367 = vadd.f32 %v347, %v366
        %368 = vset.pattern.permute.xlu0 3
        %369 = vperm.xlu0 %368, %v280
        %v370 = vpop.permute.xlu0 %369
        %v372 = vmul.f32 %v370, %v293
        %v373 = vadd.f32 %v299, %v372
        %374 = vset.pattern.permute.xlu0 3
        %375 = vperm.xlu0 %374, %v281
        %v376 = vpop.permute.xlu0 %375
        %v378 = vmul.f32 %v376, %v311
        %v379 = vadd.f32 %v373, %v378
        %380 = vset.pattern.permute.xlu0 3
        %381 = vperm.xlu0 %380, %v282
        %v382 = vpop.permute.xlu0 %381
        %v384 = vmul.f32 %v382, %v323
        %v385 = vadd.f32 %v379, %v384
        %v386 = vmax.f32 %v385, 0.0
        %v387 = vadd.f32 %v367, %v386
        %388 = vset.pattern.permute.xlu0 4
        %389 = vperm.xlu0 %388, %v280
        %v390 = vpop.permute.xlu0 %389
        %v392 = vmul.f32 %v390, %v293
        %v393 = vadd.f32 %v299, %v392
        %394 = vset.pattern.permute.xlu0 4
        %395 = vperm.xlu0 %394, %v281
        %v396 = vpop.permute.xlu0 %395
        %v398 = vmul.f32 %v396, %v311
        %v399 = vadd.f32 %v393, %v398
        %400 = vset.pattern.permute.xlu0 4
        %401 = vperm.xlu0 %400, %v282
        %v402 = vpop.permute.xlu0 %401
        %v404 = vmul.f32 %v402, %v323
        %v405 = vadd.f32 %v399, %v404
        %v406 = vmax.f32 %v405, 0.0
        %v407 = vadd.f32 %v387, %v406
        %408 = vset.pattern.permute.xlu0 5
        %409 = vperm.xlu0 %408, %v280
        %v410 = vpop.permute.xlu0 %409
        %v412 = vmul.f32 %v410, %v293
        %v413 = vadd.f32 %v299, %v412
        %414 = vset.pattern.permute.xlu0 5
        %415 = vperm.xlu0 %414, %v281
        %v416 = vpop.permute.xlu0 %415
        %v418 = vmul.f32 %v416, %v311
        %v419 = vadd.f32 %v413, %v418
        %420 = vset.pattern.permute.xlu0 5
        %421 = vperm.xlu0 %420, %v282
        %v422 = vpop.permute.xlu0 %421
        %v424 = vmul.f32 %v422, %v323
        %v425 = vadd.f32 %v419, %v424
        %v426 = vmax.f32 %v425, 0.0
        %v427 = vadd.f32 %v407, %v426
        %428 = vset.pattern.permute.xlu0 6
        %429 = vperm.xlu0 %428, %v280
        %v430 = vpop.permute.xlu0 %429
        %v432 = vmul.f32 %v430, %v293
        %v433 = vadd.f32 %v299, %v432
        %434 = vset.pattern.permute.xlu0 6
        %435 = vperm.xlu0 %434, %v281
        %v436 = vpop.permute.xlu0 %435
        %v438 = vmul.f32 %v436, %v311
        %v439 = vadd.f32 %v433, %v438
        %440 = vset.pattern.permute.xlu0 6
        %441 = vperm.xlu0 %440, %v282
        %v442 = vpop.permute.xlu0 %441
        %v444 = vmul.f32 %v442, %v323
        %v445 = vadd.f32 %v439, %v444
        %v446 = vmax.f32 %v445, 0.0
        %v447 = vadd.f32 %v427, %v446
        %448 = vset.pattern.permute.xlu0 7
        %449 = vperm.xlu0 %448, %v280
        %v450 = vpop.permute.xlu0 %449
        %v452 = vmul.f32 %v450, %v293
        %v453 = vadd.f32 %v299, %v452
        %454 = vset.pattern.permute.xlu0 7
        %455 = vperm.xlu0 %454, %v281
        %v456 = vpop.permute.xlu0 %455
        %v458 = vmul.f32 %v456, %v311
        %v459 = vadd.f32 %v453, %v458
        %460 = vset.pattern.permute.xlu0 7
        %461 = vperm.xlu0 %460, %v282
        %v462 = vpop.permute.xlu0 %461
        %v464 = vmul.f32 %v462, %v323
        %v465 = vadd.f32 %v459, %v464
        %v466 = vmax.f32 %v465, 0.0
        %v467 = vadd.f32 %v447, %v466
        %468 = vset.pattern.permute.xlu0 8
        %469 = vperm.xlu0 %468, %v280
        %v470 = vpop.permute.xlu0 %469
        %v472 = vmul.f32 %v470, %v293
        %v473 = vadd.f32 %v299, %v472
        %474 = vset.pattern.permute.xlu0 8
        %475 = vperm.xlu0 %474, %v281
        %v476 = vpop.permute.xlu0 %475
        %v478 = vmul.f32 %v476, %v311
        %v479 = vadd.f32 %v473, %v478
        %480 = vset.pattern.permute.xlu0 8
        %481 = vperm.xlu0 %480, %v282
        %v482 = vpop.permute.xlu0 %481
        %v484 = vmul.f32 %v482, %v323
        %v485 = vadd.f32 %v479, %v484
        %v486 = vmax.f32 %v485, 0.0
        %v487 = vadd.f32 %v467, %v486
        %488 = vset.pattern.permute.xlu0 9
        %489 = vperm.xlu0 %488, %v280
        %v490 = vpop.permute.xlu0 %489
        %v492 = vmul.f32 %v490, %v293
        %v493 = vadd.f32 %v299, %v492
        %494 = vset.pattern.permute.xlu0 9
        %495 = vperm.xlu0 %494, %v281
        %v496 = vpop.permute.xlu0 %495
        %v498 = vmul.f32 %v496, %v311
        %v499 = vadd.f32 %v493, %v498
        %500 = vset.pattern.permute.xlu0 9
        %501 = vperm.xlu0 %500, %v282
        %v502 = vpop.permute.xlu0 %501
        %v504 = vmul.f32 %v502, %v323
        %v505 = vadd.f32 %v499, %v504
        %v506 = vmax.f32 %v505, 0.0
        %v507 = vadd.f32 %v487, %v506
        %508 = vset.pattern.permute.xlu0 10
        %509 = vperm.xlu0 %508, %v280
        %v510 = vpop.permute.xlu0 %509
        %v512 = vmul.f32 %v510, %v293
        %v513 = vadd.f32 %v299, %v512
        %514 = vset.pattern.permute.xlu0 10
        %515 = vperm.xlu0 %514, %v281
        %v516 = vpop.permute.xlu0 %515
        %v518 = vmul.f32 %v516, %v311
        %v519 = vadd.f32 %v513, %v518
        %520 = vset.pattern.permute.xlu0 10
        %521 = vperm.xlu0 %520, %v282
        %v522 = vpop.permute.xlu0 %521
        %v524 = vmul.f32 %v522, %v323
        %v525 = vadd.f32 %v519, %v524
        %v526 = vmax.f32 %v525, 0.0
        %v527 = vadd.f32 %v507, %v526
        %528 = vset.pattern.permute.xlu0 11
        %529 = vperm.xlu0 %528, %v280
        %v530 = vpop.permute.xlu0 %529
        %v532 = vmul.f32 %v530, %v293
        %v533 = vadd.f32 %v299, %v532
        %534 = vset.pattern.permute.xlu0 11
        %535 = vperm.xlu0 %534, %v281
        %v536 = vpop.permute.xlu0 %535
        %v538 = vmul.f32 %v536, %v311
        %v539 = vadd.f32 %v533, %v538
        %540 = vset.pattern.permute.xlu0 11
        %541 = vperm.xlu0 %540, %v282
        %v542 = vpop.permute.xlu0 %541
        %v544 = vmul.f32 %v542, %v323
        %v545 = vadd.f32 %v539, %v544
        %v546 = vmax.f32 %v545, 0.0
        %v547 = vadd.f32 %v527, %v546
        %548 = vset.pattern.permute.xlu0 12
        %549 = vperm.xlu0 %548, %v280
        %v550 = vpop.permute.xlu0 %549
        %v552 = vmul.f32 %v550, %v293
        %v553 = vadd.f32 %v299, %v552
        %554 = vset.pattern.permute.xlu0 12
        %555 = vperm.xlu0 %554, %v281
        %v556 = vpop.permute.xlu0 %555
        %v558 = vmul.f32 %v556, %v311
        %v559 = vadd.f32 %v553, %v558
        %560 = vset.pattern.permute.xlu0 12
        %561 = vperm.xlu0 %560, %v282
        %v562 = vpop.permute.xlu0 %561
        %v564 = vmul.f32 %v562, %v323
        %v565 = vadd.f32 %v559, %v564
        %v566 = vmax.f32 %v565, 0.0
        %v567 = vadd.f32 %v547, %v566
        %568 = vset.pattern.permute.xlu0 13
        %569 = vperm.xlu0 %568, %v280
        %v570 = vpop.permute.xlu0 %569
        %v572 = vmul.f32 %v570, %v293
        %v573 = vadd.f32 %v299, %v572
        %574 = vset.pattern.permute.xlu0 13
        %575 = vperm.xlu0 %574, %v281
        %v576 = vpop.permute.xlu0 %575
        %v578 = vmul.f32 %v576, %v311
        %v579 = vadd.f32 %v573, %v578
        %580 = vset.pattern.permute.xlu0 13
        %581 = vperm.xlu0 %580, %v282
        %v582 = vpop.permute.xlu0 %581
        %v584 = vmul.f32 %v582, %v323
        %v585 = vadd.f32 %v579, %v584
        %v586 = vmax.f32 %v585, 0.0
        %v587 = vadd.f32 %v567, %v586
        %588 = vset.pattern.permute.xlu0 14
        %589 = vperm.xlu0 %588, %v280
        %v590 = vpop.permute.xlu0 %589
        %v592 = vmul.f32 %v590, %v293
        %v593 = vadd.f32 %v299, %v592
        %594 = vset.pattern.permute.xlu0 14
        %595 = vperm.xlu0 %594, %v281
        %v596 = vpop.permute.xlu0 %595
        %v598 = vmul.f32 %v596, %v311
        %v599 = vadd.f32 %v593, %v598
        %600 = vset.pattern.permute.xlu0 14
        %601 = vperm.xlu0 %600, %v282
        %v602 = vpop.permute.xlu0 %601
        %v604 = vmul.f32 %v602, %v323
        %v605 = vadd.f32 %v599, %v604
        %v606 = vmax.f32 %v605, 0.0
        %v607 = vadd.f32 %v587, %v606
        %608 = vset.pattern.permute.xlu0 15
        %609 = vperm.xlu0 %608, %v280
        %v610 = vpop.permute.xlu0 %609
        %v612 = vmul.f32 %v610, %v293
        %v613 = vadd.f32 %v299, %v612
        %614 = vset.pattern.permute.xlu0 15
        %615 = vperm.xlu0 %614, %v281
        %v616 = vpop.permute.xlu0 %615
        %v618 = vmul.f32 %v616, %v311
        %v619 = vadd.f32 %v613, %v618
        %620 = vset.pattern.permute.xlu0 15
        %621 = vperm.xlu0 %620, %v282
        %v622 = vpop.permute.xlu0 %621
        %v624 = vmul.f32 %v622, %v323
        %v625 = vadd.f32 %v619, %v624
        %v626 = vmax.f32 %v625, 0.0
        %v627 = vadd.f32 %v607, %v626
        %v628 = vmul.f32 %v627, 0.0625
        %629 = vst [vmem:[%s259] sm:$0xff] %v628
        %s630 = sand.u32 %s156, 1
        %s631 = scalar_lea.sflag [#allocation4], %s630
        %s632 = sand.u32 %s156, 1
        %s633 = smul.addr %s632, 8
        %s634 = scalar_lea.vmem [#allocation5], %s633
        // Predicated region
        $region45: #{tpu_custom_call.1} parent=39 // pred_check
          %p635 = pneg %p166
        $region46: #{tpu_custom_call.1} parent=39 // pred_check_branch
          %637 = sbr.rel (%p635) target = $region48
        $region47: #{tpu_custom_call.1} parent=39 // pred_region
          %s639 = ssub.s32 128, 128
          %640 = vsyncadd %s631, %s639
          %s641 = smul.addr %s26, 2
          %s642 = sadd.s32 %s27, %s641
          %s643 = smul.addr %s642, 128
          %s644 = scalar_lea.hbm %s5, %s643
          %s646 = sshll.u32 %s634, 4
          %s647 = int_to_ptr.vmem [resolvable:$true] %s646
          %649 = dma.vmem_to_hbm [thread:$0]  %s647, 128, %s644, %s631
        $region48: #{tpu_custom_call.1} parent=39 // pred_fallthru
          _
      $region40: #{tpu_custom_call.1} parent=5 // pred_fallthru
        _
      %p650 = scmp.le.s32.totalorder 2, %s17
      // Predicated region
      $region49: #{tpu_custom_call.1} parent=5 // pred_check
        %p651 = pneg %p650
      $region50: #{tpu_custom_call.1} parent=5 // pred_check_branch
        %653 = sbr.rel (%p651) target = $region52
      $region51: #{tpu_custom_call.1} parent=5 // pred_region
        %s654 = ssub.s32 %s17, 2
        // Predicated region
        $region53: #{tpu_custom_call.1} parent=51 // pred_check
          %p655 = pneg %p172
        $region54: #{tpu_custom_call.1} parent=51 // pred_check_branch
          %657 = sbr.rel (%p655) target = $region56
        $region55: #{tpu_custom_call.1} parent=51 // pred_region
          %s658 = sand.u32 %s157, 1
          %s659 = scalar_lea.sflag [#allocation4], %s658
          %s660 = sand.u32 %s157, 1
          %s661 = smul.addr %s660, 8
          %s662 = scalar_lea.vmem [#allocation5], %s661
          %663 = dma.done %s659, 128
        $region56: #{tpu_custom_call.1} parent=51 // pred_fallthru
          _
      $region52: #{tpu_custom_call.1} parent=5 // pred_fallthru
        _
    $region6: #{tpu_custom_call.1} parent=1 // loop_footer
      %s21 = sadd.s32 1, %s17
    $region7: #{tpu_custom_call.1} parent=1 // loop_footer_branch
      %16 = sbr.rel target = $region3
    $region8: #{tpu_custom_call.1} parent=1 // loop_exit
      _
    %664 = vsyncpa [#allocation3], 1
    %s665 = scalar_lea.sflag [#allocation3], 1
    %666 = vsyncpa %s665, 1
    %667 = vsyncpa [#allocation4], 1
    %s668 = scalar_lea.sflag [#allocation4], 1
    %669 = vsyncpa %s668, 1

</llo_original>
